<compile_context>
chip_gen: v7x
topology: tpu7x:2x2x1
jax: 0.10.0
libtpu: 0.0.40
codegen_flags: <defaults>
</compile_context>

<pallas_src>
import functools

import jax
import jax.numpy as jnp
from jax import lax
from jax.experimental import pallas as pl
from jax.experimental.pallas import tpu as pltpu

N_GENRES = 10   # len(GENRE_COLUMNS)
NPAD = 128      # lane-padded FC output width


# ----------------------------------------------------------------------------
# Pallas kernel: fused bidirectional LSTM recurrence + mean pool + fc
# Grid: (batch_blocks [parallel], time_chunks [arbitrary])
# ----------------------------------------------------------------------------
def _bilstm_pool_fc_kernel(
    gxf_ref,    # (tc, tb, 4H)  forward x-projection gates [i,f,o,g], bias folded in
    gxb_ref,    # (tc, tb, 4H)  backward gates; chunk is reverse-indexed over time
    whhf_ref,   # (H, 4H)       forward hidden->hidden weights, cols [i,f,o,g]
    whhb_ref,   # (H, 4H)       backward hidden->hidden weights, cols [i,f,o,g]
    fcw_ref,    # (2H, NPAD)    fc weights (rows 0:H fwd, H:2H bwd; cols 0:10 live)
    fcb_ref,    # (1, NPAD)     fc bias (cols 0:10 live)
    out_ref,    # (tb, NPAD)
    hf_s, cf_s, hb_s, cb_s, accf_s, accb_s,   # (tb, H) f32 scratch, carried across chunks
    *, inv_t, unroll,
):
    t_blk = pl.program_id(1)
    n_blk = pl.num_programs(1)
    TC, _tb, G4 = gxf_ref.shape
    H = G4 // 4
    H3 = 3 * H

    # Start of a new batch block's sequence: reset recurrent state + mean accumulators.
    @pl.when(t_blk == 0)
    def _init():
        for ref in (hf_s, cf_s, hb_s, cb_s, accf_s, accb_s):
            ref[...] = jnp.zeros_like(ref)

    def step(s, carry):
        hf, cf, hb, cb, af, ab = carry
        # Per-direction dots (no zero-padded block-diagonal W_hh), f32 accumulation.
        gf = gxf_ref[s].astype(jnp.float32) + jnp.dot(
            hf, whhf_ref[...], preferred_element_type=jnp.float32)
        gb = gxb_ref[TC - 1 - s].astype(jnp.float32) + jnp.dot(
            hb, whhb_ref[...], preferred_element_type=jnp.float32)
        # [i, f, o, g] lane order -> one contiguous sigmoid slice + one tanh slice per dir.
        sig_f = jax.nn.sigmoid(gf[:, :H3])
        g_f = jnp.tanh(gf[:, H3:])
        sig_b = jax.nn.sigmoid(gb[:, :H3])
        g_b = jnp.tanh(gb[:, H3:])
        i_f, f_f, o_f = sig_f[:, :H], sig_f[:, H:2 * H], sig_f[:, 2 * H:]
        i_b, f_b, o_b = sig_b[:, :H], sig_b[:, H:2 * H], sig_b[:, 2 * H:]
        cf_n = f_f * cf + i_f * g_f
        cb_n = f_b * cb + i_b * g_b
        hf_n = o_f * jnp.tanh(cf_n)
        hb_n = o_b * jnp.tanh(cb_n)
        return hf_n, cf_n, hb_n, cb_n, af + hf_n, ab + hb_n

    carry0 = (hf_s[...], cf_s[...], hb_s[...], cb_s[...], accf_s[...], accb_s[...])
    hf, cf, hb, cb, af, ab = lax.fori_loop(0, TC, step, carry0, unroll=unroll)
    hf_s[...] = hf
    cf_s[...] = cf
    hb_s[...] = hb
    cb_s[...] = cb
    accf_s[...] = af
    accb_s[...] = ab

    # Last time chunk: mean pool (dropout is eval-mode identity) + lane-dense FC store.
    @pl.when(t_blk == n_blk - 1)
    def _finalize():
        fcw = fcw_ref[...]
        pooled_f = af * jnp.float32(inv_t)
        pooled_b = ab * jnp.float32(inv_t)
        out_ref[...] = (
            jnp.dot(pooled_f, fcw[:H, :], preferred_element_type=jnp.float32)
            + jnp.dot(pooled_b, fcw[H:, :], preferred_element_type=jnp.float32)
            + fcb_ref[...]
        )


# ----------------------------------------------------------------------------
# Wrapper helpers
# ----------------------------------------------------------------------------
def _reorder_ifgo_to_ifog(w):
    """Reorder PyTorch-style gate blocks [i, f, g, o] -> [i, f, o, g] along last axis."""
    i, f, g, o = jnp.split(w, 4, axis=-1)
    return jnp.concatenate([i, f, o, g], axis=-1)


def _batch_tile(batch):
    """Multiple of 8, prefer >= 2 grid steps (v7x megacore), as large as reasonable."""
    if batch <= 8:
        return batch
    for need_two_steps in (True, False):
        for cand in (512, 256, 128, 64, 32, 16, 8):
            if batch % cand == 0 and (not need_two_steps or batch // cand >= 2):
                return cand
    return batch  # TODO(synk): pad ragged batch sizes instead of taking one full block.


def _time_chunk(seq_len, tb, hid, gate_bytes, budget_bytes=20 * 1024 * 1024):
    """Largest divisor of T whose double-buffered 2-direction slab chunk fits the budget."""
    per_step = 2 * 2 * tb * 4 * hid * gate_bytes   # 2 dirs x double-buffer x (tb,4H)
    max_tc = max(1, budget_bytes // per_step)
    best = 1
    for cand in range(1, seq_len + 1):
        if seq_len % cand == 0 and cand <= max_tc:
            best = cand
    return best


# ----------------------------------------------------------------------------
# Forward pass
# ----------------------------------------------------------------------------
@functools.partial(jax.jit, static_argnames=("t_chunk", "gates_dtype"))
def genre_lstm_forward(x_idx, params, *, t_chunk=None, gates_dtype=jnp.bfloat16):
    """x_idx: (B, T) int32 token ids. Returns (B, 10) logits."""
    emb = params["emb"]                                   # (V, E)
    B, T = x_idx.shape
    E = emb.shape[1]
    H = params["whh_f"].shape[0]
    hi = lax.Precision.HIGHEST

    # Gate columns reordered [i,f,g,o] -> [i,f,o,g] (per direction).
    wih_f = _reorder_ifgo_to_ifog(params["wih_f"])
    whh_f = _reorder_ifgo_to_ifog(params["whh_f"])
    b_f = _reorder_ifgo_to_ifog(params["b_f"])
    wih_b = _reorder_ifgo_to_ifog(params["wih_b"])
    whh_b = _reorder_ifgo_to_ifog(params["whh_b"])
    b_b = _reorder_ifgo_to_ifog(params["b_b"])

    # Embedding gather (data-dependent) stays in XLA; hoisted input projection writes each
    # direction's slab straight to its final layout — no reorder/reversal copy in HBM.
    x_tbe = jnp.transpose(jnp.take(emb, x_idx, axis=0), (1, 0, 2))    # (T, B, E) time-major
    x2d = x_tbe.reshape(T * B, E)
    gx_f = (jnp.dot(x2d, wih_f, precision=hi) + b_f).astype(gates_dtype).reshape(T, B, 4 * H)
    gx_b = (jnp.dot(x2d, wih_b, precision=hi) + b_b).astype(gates_dtype).reshape(T, B, 4 * H)

    # Lane-padded FC params (rows 0:H fwd, H:2H bwd; cols 0:10 live, rest zero).
    fcw = (
        jnp.zeros((2 * H, NPAD), jnp.float32)
        .at[:, :N_GENRES]
        .set(jnp.concatenate([params["fcw_f"], params["fcw_b"]], axis=0))
    )
    fcb = jnp.zeros((1, NPAD), jnp.float32).at[:, :N_GENRES].set(params["fcb"])

    tb = _batch_tile(B)
    if t_chunk is None:
        t_chunk = _time_chunk(T, tb, H, jnp.dtype(gates_dtype).itemsize)
    assert T % t_chunk == 0, "t_chunk must divide T"
    n_tc = T // t_chunk

    kernel = functools.partial(
        _bilstm_pool_fc_kernel, inv_t=1.0 / T, unroll=min(t_chunk, 8))

    out_padded = pl.pallas_call(
        kernel,
        out_shape=jax.ShapeDtypeStruct((B, NPAD), jnp.float32),
        grid_spec=pltpu.PrefetchScalarGridSpec(
            num_scalar_prefetch=0,
            grid=(B // tb, n_tc),
            in_specs=[
                # forward gates chunk: natural time order
                pl.BlockSpec((t_chunk, tb, 4 * H), lambda b, t: (t, b, 0)),
                # backward gates chunk: reverse-indexed over the time-chunk axis
                pl.BlockSpec((t_chunk, tb, 4 * H), lambda b, t: (n_tc - 1 - t, b, 0)),
                pl.BlockSpec((H, 4 * H), lambda b, t: (0, 0)),        # W_hh forward
                pl.BlockSpec((H, 4 * H), lambda b, t: (0, 0)),        # W_hh backward
                pl.BlockSpec((2 * H, NPAD), lambda b, t: (0, 0)),     # fc W
                pl.BlockSpec((1, NPAD), lambda b, t: (0, 0)),         # fc b
            ],
            out_specs=pl.BlockSpec((tb, NPAD), lambda b, t: (b, 0)),
            scratch_shapes=[pltpu.VMEM((tb, H), jnp.float32)] * 6,    # h/c/acc per direction
        ),
        compiler_params=pltpu.CompilerParams(
            dimension_semantics=("parallel", "arbitrary"),
            vmem_limit_bytes=32 * 1024 * 1024,
        ),
    )(gx_f, gx_b, whh_f, whh_b, fcw, fcb)

    return out_padded[:, :N_GENRES]


# ----------------------------------------------------------------------------
# Pure-JAX reference (mirrors the PyTorch forward, eval mode)
# ----------------------------------------------------------------------------
def genre_lstm_reference(x_idx, params):
    hi = lax.Precision.HIGHEST
    emb = params["emb"]
    x_emb = jnp.take(emb, x_idx, axis=0)                  # (B, T, E)
    B, T, E = x_emb.shape
    H = params["whh_f"].shape[0]
    xs = jnp.transpose(x_emb, (1, 0, 2))                  # (T, B, E)

    def run(seq, wih, whh, b):
        def step(carry, x_t):
            h, c = carry
            g = jnp.dot(x_t, wih, precision=hi) + jnp.dot(h, whh, precision=hi) + b
            i = jax.nn.sigmoid(g[:, :H])
            f = jax.nn.sigmoid(g[:, H:2 * H])
            gg = jnp.tanh(g[:, 2 * H:3 * H])
            o = jax.nn.sigmoid(g[:, 3 * H:])
            c = f * c + i * gg
            h = o * jnp.tanh(c)
            return (h, c), h

        (_, _), hs = lax.scan(
            step,
            (jnp.zeros((B, H), jnp.float32), jnp.zeros((B, H), jnp.float32)),
            seq,
        )
        return hs                                          # (T, B, H)

    h_f = run(xs, params["wih_f"], params["whh_f"], params["b_f"])
    h_b = run(xs[::-1], params["wih_b"], params["whh_b"], params["b_b"])
    pooled = jnp.concatenate([h_f.mean(axis=0), h_b.mean(axis=0)], axis=-1)   # (B, 2H)
    fcw = jnp.concatenate([params["fcw_f"], params["fcw_b"]], axis=0)          # (2H, 10)
    return jnp.dot(pooled, fcw, precision=hi) + params["fcb"]


# ----------------------------------------------------------------------------
# Deterministic parameter construction (gate order [i, f, g, o], PyTorch convention)
# ----------------------------------------------------------------------------
def make_params(key, vocab_size, emb_dim, hid):
    ks = jax.random.split(key, 12)
    s = 1.0 / jnp.sqrt(jnp.float32(hid))

    def u(k, shape):
        return jax.random.uniform(k, shape, jnp.float32, -s, s)

    return {
        "emb": jax.random.normal(ks[0], (vocab_size, emb_dim), jnp.float32),
        # forward direction (pre-transposed: (in, 4H))
        "wih_f": u(ks[1], (emb_dim, 4 * hid)),
        "whh_f": u(ks[2], (hid, 4 * hid)),
        "b_f":   u(ks[3], (1, 4 * hid)) + u(ks[4], (1, 4 * hid)),  # b_ih + b_hh
        # backward direction
        "wih_b": u(ks[5], (emb_dim, 4 * hid)),
        "whh_b": u(ks[6], (hid, 4 * hid)),
        "b_b":   u(ks[7], (1, 4 * hid)) + u(ks[8], (1, 4 * hid)),
        # fc (2H, 10) split into forward/backward halves, pre-transposed
        "fcw_f": u(ks[9], (hid, N_GENRES)),
        "fcw_b": u(ks[10], (hid, N_GENRES)),
        "fcb":   u(ks[11], (1, N_GENRES)),
    }


if __name__ == "__main__":
    B, T = 2, 8           # batch, sequence length
    V, E, H = 50, 32, 32  # vocab, embedding dim, hidden size

    key = jax.random.PRNGKey(0)
    k_par, k_idx = jax.random.split(key)
    params = make_params(k_par, V, E, H)
    x_idx = jax.random.randint(k_idx, (B, T), 0, V, dtype=jnp.int32)

    ref = genre_lstm_reference(x_idx, params)

    # f32 gates slab, streamed over time in 2 chunks (exercises the cross-chunk h/c carry).
    out_f32 = jax.block_until_ready(
        genre_lstm_forward(x_idx, params, t_chunk=4, gates_dtype=jnp.float32))
    assert out_f32.shape == (B, N_GENRES)
    assert jnp.allclose(out_f32, ref, atol=5e-3, rtol=5e-3), (out_f32, ref)

    # Production path: bf16 gates slab (half the HBM traffic / VMEM), looser tolerance.
    out_bf16 = jax.block_until_ready(
        genre_lstm_forward(x_idx, params, gates_dtype=jnp.bfloat16))
    assert out_bf16.shape == (B, N_GENRES)
    assert jnp.allclose(out_bf16, ref, atol=5e-2, rtol=5e-2), (out_bf16, ref)

    print("KERNEL_OK")
</pallas_src>

<mosaic_0001>
module attributes {stable_mosaic.version = 11 : i64} {
  func.func @_bilstm_pool_fc_kernel(%arg0: i32, %arg1: i32, %arg2: memref<4x2x128xf32, #tpu.memory_space<vmem>>, %arg3: memref<4x2x128xf32, #tpu.memory_space<vmem>>, %arg4: memref<32x128xf32, #tpu.memory_space<vmem>>, %arg5: memref<32x128xf32, #tpu.memory_space<vmem>>, %arg6: memref<64x128xf32, #tpu.memory_space<vmem>>, %arg7: memref<1x128xf32, #tpu.memory_space<vmem>>, %arg8: memref<2x128xf32, #tpu.memory_space<vmem>>, %arg9: memref<2x32xf32, #tpu.memory_space<vmem>>, %arg10: memref<2x32xf32, #tpu.memory_space<vmem>>, %arg11: memref<2x32xf32, #tpu.memory_space<vmem>>, %arg12: memref<2x32xf32, #tpu.memory_space<vmem>>, %arg13: memref<2x32xf32, #tpu.memory_space<vmem>>, %arg14: memref<2x32xf32, #tpu.memory_space<vmem>>) attributes {dimension_semantics = [#tpu.dimension_semantics<parallel>, #tpu.dimension_semantics<arbitrary>], iteration_bounds = array<i64: 1, 2>, scalar_prefetch = 0 : i64, scratch_operands = 6 : i64, tpu.core_type = #tpu.core_type<tc>, window_params = [{transform_indices = @transform_0, window_bounds = array<i64: 4, 2, 128>}, {transform_indices = @transform_1, window_bounds = array<i64: 4, 2, 128>}, {pipeline_mode = #tpu.pipeline_mode<synchronous>, transform_indices = @transform_2, window_bounds = array<i64: 32, 128>}, {pipeline_mode = #tpu.pipeline_mode<synchronous>, transform_indices = @transform_3, window_bounds = array<i64: 32, 128>}, {pipeline_mode = #tpu.pipeline_mode<synchronous>, transform_indices = @transform_4, window_bounds = array<i64: 64, 128>}, {pipeline_mode = #tpu.pipeline_mode<synchronous>, transform_indices = @transform_5, window_bounds = array<i64: 1, 128>}, {transform_indices = @transform_6, window_bounds = array<i64: 2, 128>}]} {
    %c0_i32 = arith.constant 0 : i32
    %0 = arith.cmpi eq, %arg1, %c0_i32 : i32
    %1 = arith.extui %0 : i1 to i32
    %c0_i32_0 = arith.constant 0 : i32
    %2 = arith.cmpi ne, %1, %c0_i32_0 : i32
    scf.if %2 {
      %cst_78 = arith.constant 0.000000e+00 : f32
      %206 = vector.broadcast %cst_78 : f32 to vector<2x32xf32>
      %c0_79 = arith.constant 0 : index
      %c0_80 = arith.constant 0 : index
      %207 = vector.load %arg9[%c0_79, %c0_80] : memref<2x32xf32, #tpu.memory_space<vmem>>, vector<2x32xf32>
      tpu.vector_store %arg9[%c0_79, %c0_80], %206 {strides = array<i32>} : memref<2x32xf32, #tpu.memory_space<vmem>>, vector<2x32xf32>,
      %cst_81 = arith.constant 0.000000e+00 : f32
      %208 = vector.broadcast %cst_81 : f32 to vector<2x32xf32>
      %c0_82 = arith.constant 0 : index
      %c0_83 = arith.constant 0 : index
      %209 = vector.load %arg10[%c0_82, %c0_83] : memref<2x32xf32, #tpu.memory_space<vmem>>, vector<2x32xf32>
      tpu.vector_store %arg10[%c0_82, %c0_83], %208 {strides = array<i32>} : memref<2x32xf32, #tpu.memory_space<vmem>>, vector<2x32xf32>,
      %cst_84 = arith.constant 0.000000e+00 : f32
      %210 = vector.broadcast %cst_84 : f32 to vector<2x32xf32>
      %c0_85 = arith.constant 0 : index
      %c0_86 = arith.constant 0 : index
      %211 = vector.load %arg11[%c0_85, %c0_86] : memref<2x32xf32, #tpu.memory_space<vmem>>, vector<2x32xf32>
      tpu.vector_store %arg11[%c0_85, %c0_86], %210 {strides = array<i32>} : memref<2x32xf32, #tpu.memory_space<vmem>>, vector<2x32xf32>,
      %cst_87 = arith.constant 0.000000e+00 : f32
      %212 = vector.broadcast %cst_87 : f32 to vector<2x32xf32>
      %c0_88 = arith.constant 0 : index
      %c0_89 = arith.constant 0 : index
      %213 = vector.load %arg12[%c0_88, %c0_89] : memref<2x32xf32, #tpu.memory_space<vmem>>, vector<2x32xf32>
      tpu.vector_store %arg12[%c0_88, %c0_89], %212 {strides = array<i32>} : memref<2x32xf32, #tpu.memory_space<vmem>>, vector<2x32xf32>,
      %cst_90 = arith.constant 0.000000e+00 : f32
      %214 = vector.broadcast %cst_90 : f32 to vector<2x32xf32>
      %c0_91 = arith.constant 0 : index
      %c0_92 = arith.constant 0 : index
      %215 = vector.load %arg13[%c0_91, %c0_92] : memref<2x32xf32, #tpu.memory_space<vmem>>, vector<2x32xf32>
      tpu.vector_store %arg13[%c0_91, %c0_92], %214 {strides = array<i32>} : memref<2x32xf32, #tpu.memory_space<vmem>>, vector<2x32xf32>,
      %cst_93 = arith.constant 0.000000e+00 : f32
      %216 = vector.broadcast %cst_93 : f32 to vector<2x32xf32>
      %c0_94 = arith.constant 0 : index
      %c0_95 = arith.constant 0 : index
      %217 = vector.load %arg14[%c0_94, %c0_95] : memref<2x32xf32, #tpu.memory_space<vmem>>, vector<2x32xf32>
      tpu.vector_store %arg14[%c0_94, %c0_95], %216 {strides = array<i32>} : memref<2x32xf32, #tpu.memory_space<vmem>>, vector<2x32xf32>,
    } else {
    }
    %c0 = arith.constant 0 : index
    %c0_1 = arith.constant 0 : index
    %3 = vector.load %arg9[%c0, %c0_1] : memref<2x32xf32, #tpu.memory_space<vmem>>, vector<2x32xf32>
    %c0_2 = arith.constant 0 : index
    %c0_3 = arith.constant 0 : index
    %4 = vector.load %arg10[%c0_2, %c0_3] : memref<2x32xf32, #tpu.memory_space<vmem>>, vector<2x32xf32>
    %c0_4 = arith.constant 0 : index
    %c0_5 = arith.constant 0 : index
    %5 = vector.load %arg11[%c0_4, %c0_5] : memref<2x32xf32, #tpu.memory_space<vmem>>, vector<2x32xf32>
    %c0_6 = arith.constant 0 : index
    %c0_7 = arith.constant 0 : index
    %6 = vector.load %arg12[%c0_6, %c0_7] : memref<2x32xf32, #tpu.memory_space<vmem>>, vector<2x32xf32>
    %c0_8 = arith.constant 0 : index
    %c0_9 = arith.constant 0 : index
    %7 = vector.load %arg13[%c0_8, %c0_9] : memref<2x32xf32, #tpu.memory_space<vmem>>, vector<2x32xf32>
    %c0_10 = arith.constant 0 : index
    %c0_11 = arith.constant 0 : index
    %8 = vector.load %arg14[%c0_10, %c0_11] : memref<2x32xf32, #tpu.memory_space<vmem>>, vector<2x32xf32>
    %c0_i32_12 = arith.constant 0 : i32
    %9 = arith.index_cast %c0_i32_12 : i32 to index
    %c0_13 = arith.constant 0 : index
    %c0_14 = arith.constant 0 : index
    %10 = vector.load %arg2[%9, %c0_13, %c0_14] : memref<4x2x128xf32, #tpu.memory_space<vmem>>, vector<1x2x128xf32>
    %11 = vector.shape_cast %10 : vector<1x2x128xf32> to vector<2x128xf32>
    %c0_15 = arith.constant 0 : index
    %c0_16 = arith.constant 0 : index
    %12 = vector.load %arg4[%c0_15, %c0_16] : memref<32x128xf32, #tpu.memory_space<vmem>>, vector<32x128xf32>
    %cst = arith.constant dense<0.000000e+00> : vector<2x128xf32>
    %13 = tpu.matmul %3, %12, %cst {dimension_numbers = #tpu.dot_dimension_numbers<[1], [0], [0], [1], [0, 0, 1, 1], [], []>} : vector<2x32xf32>, vector<32x128xf32>, vector<2x128xf32> -> vector<2x128xf32>
    %14 = arith.addf %11, %13 : vector<2x128xf32>
    %c3_i32 = arith.constant 3 : i32
    %15 = arith.subi %c3_i32, %c0_i32_12 : i32
    %16 = arith.index_cast %15 : i32 to index
    %c0_17 = arith.constant 0 : index
    %c0_18 = arith.constant 0 : index
    %17 = vector.load %arg3[%16, %c0_17, %c0_18] : memref<4x2x128xf32, #tpu.memory_space<vmem>>, vector<1x2x128xf32>
    %18 = vector.shape_cast %17 : vector<1x2x128xf32> to vector<2x128xf32>
    %c0_19 = arith.constant 0 : index
    %c0_20 = arith.constant 0 : index
    %19 = vector.load %arg5[%c0_19, %c0_20] : memref<32x128xf32, #tpu.memory_space<vmem>>, vector<32x128xf32>
    %cst_21 = arith.constant dense<0.000000e+00> : vector<2x128xf32>
    %20 = tpu.matmul %5, %19, %cst_21 {dimension_numbers = #tpu.dot_dimension_numbers<[1], [0], [0], [1], [0, 0, 1, 1], [], []>} : vector<2x32xf32>, vector<32x128xf32>, vector<2x128xf32> -> vector<2x128xf32>
    %21 = arith.addf %18, %20 : vector<2x128xf32>
    %22 = vector.extract_strided_slice %14 {offsets = [0, 0], sizes = [2, 96], strides = [1, 1]} : vector<2x128xf32> to vector<2x96xf32>
    %23 = arith.negf %22 : vector<2x96xf32>
    %24 = math.exp %23 : vector<2x96xf32>
    %cst_22 = arith.constant 1.000000e+00 : f32
    %25 = vector.broadcast %cst_22 : f32 to vector<2x96xf32>
    %26 = arith.addf %25, %24 : vector<2x96xf32>
    %27 = arith.divf %25, %26 : vector<2x96xf32>
    %28 = vector.extract_strided_slice %14 {offsets = [0, 96], sizes = [2, 32], strides = [1, 1]} : vector<2x128xf32> to vector<2x32xf32>
    %29 = math.tanh %28 : vector<2x32xf32>
    %30 = vector.extract_strided_slice %21 {offsets = [0, 0], sizes = [2, 96], strides = [1, 1]} : vector<2x128xf32> to vector<2x96xf32>
    %31 = arith.negf %30 : vector<2x96xf32>
    %32 = math.exp %31 : vector<2x96xf32>
    %cst_23 = arith.constant 1.000000e+00 : f32
    %33 = vector.broadcast %cst_23 : f32 to vector<2x96xf32>
    %34 = arith.addf %33, %32 : vector<2x96xf32>
    %35 = arith.divf %33, %34 : vector<2x96xf32>
    %36 = vector.extract_strided_slice %21 {offsets = [0, 96], sizes = [2, 32], strides = [1, 1]} : vector<2x128xf32> to vector<2x32xf32>
    %37 = math.tanh %36 : vector<2x32xf32>
    %38 = vector.extract_strided_slice %27 {offsets = [0, 0], sizes = [2, 32], strides = [1, 1]} : vector<2x96xf32> to vector<2x32xf32>
    %39 = vector.extract_strided_slice %27 {offsets = [0, 32], sizes = [2, 32], strides = [1, 1]} : vector<2x96xf32> to vector<2x32xf32>
    %40 = vector.extract_strided_slice %27 {offsets = [0, 64], sizes = [2, 32], strides = [1, 1]} : vector<2x96xf32> to vector<2x32xf32>
    %41 = vector.extract_strided_slice %35 {offsets = [0, 0], sizes = [2, 32], strides = [1, 1]} : vector<2x96xf32> to vector<2x32xf32>
    %42 = vector.extract_strided_slice %35 {offsets = [0, 32], sizes = [2, 32], strides = [1, 1]} : vector<2x96xf32> to vector<2x32xf32>
    %43 = vector.extract_strided_slice %35 {offsets = [0, 64], sizes = [2, 32], strides = [1, 1]} : vector<2x96xf32> to vector<2x32xf32>
    %44 = arith.mulf %39, %4 : vector<2x32xf32>
    %45 = arith.mulf %38, %29 : vector<2x32xf32>
    %46 = arith.addf %44, %45 : vector<2x32xf32>
    %47 = arith.mulf %42, %6 : vector<2x32xf32>
    %48 = arith.mulf %41, %37 : vector<2x32xf32>
    %49 = arith.addf %47, %48 : vector<2x32xf32>
    %50 = math.tanh %46 : vector<2x32xf32>
    %51 = arith.mulf %40, %50 : vector<2x32xf32>
    %52 = math.tanh %49 : vector<2x32xf32>
    %53 = arith.mulf %43, %52 : vector<2x32xf32>
    %54 = arith.addf %7, %51 : vector<2x32xf32>
    %55 = arith.addf %8, %53 : vector<2x32xf32>
    %c1_i32 = arith.constant 1 : i32
    %56 = arith.index_cast %c1_i32 : i32 to index
    %c0_24 = arith.constant 0 : index
    %c0_25 = arith.constant 0 : index
    %57 = vector.load %arg2[%56, %c0_24, %c0_25] : memref<4x2x128xf32, #tpu.memory_space<vmem>>, vector<1x2x128xf32>
    %58 = vector.shape_cast %57 : vector<1x2x128xf32> to vector<2x128xf32>
    %c0_26 = arith.constant 0 : index
    %c0_27 = arith.constant 0 : index
    %59 = vector.load %arg4[%c0_26, %c0_27] : memref<32x128xf32, #tpu.memory_space<vmem>>, vector<32x128xf32>
    %cst_28 = arith.constant dense<0.000000e+00> : vector<2x128xf32>
    %60 = tpu.matmul %51, %59, %cst_28 {dimension_numbers = #tpu.dot_dimension_numbers<[1], [0], [0], [1], [0, 0, 1, 1], [], []>} : vector<2x32xf32>, vector<32x128xf32>, vector<2x128xf32> -> vector<2x128xf32>
    %61 = arith.addf %58, %60 : vector<2x128xf32>
    %c3_i32_29 = arith.constant 3 : i32
    %62 = arith.subi %c3_i32_29, %c1_i32 : i32
    %63 = arith.index_cast %62 : i32 to index
    %c0_30 = arith.constant 0 : index
    %c0_31 = arith.constant 0 : index
    %64 = vector.load %arg3[%63, %c0_30, %c0_31] : memref<4x2x128xf32, #tpu.memory_space<vmem>>, vector<1x2x128xf32>
    %65 = vector.shape_cast %64 : vector<1x2x128xf32> to vector<2x128xf32>
    %c0_32 = arith.constant 0 : index
    %c0_33 = arith.constant 0 : index
    %66 = vector.load %arg5[%c0_32, %c0_33] : memref<32x128xf32, #tpu.memory_space<vmem>>, vector<32x128xf32>
    %cst_34 = arith.constant dense<0.000000e+00> : vector<2x128xf32>
    %67 = tpu.matmul %53, %66, %cst_34 {dimension_numbers = #tpu.dot_dimension_numbers<[1], [0], [0], [1], [0, 0, 1, 1], [], []>} : vector<2x32xf32>, vector<32x128xf32>, vector<2x128xf32> -> vector<2x128xf32>
    %68 = arith.addf %65, %67 : vector<2x128xf32>
    %69 = vector.extract_strided_slice %61 {offsets = [0, 0], sizes = [2, 96], strides = [1, 1]} : vector<2x128xf32> to vector<2x96xf32>
    %70 = arith.negf %69 : vector<2x96xf32>
    %71 = math.exp %70 : vector<2x96xf32>
    %cst_35 = arith.constant 1.000000e+00 : f32
    %72 = vector.broadcast %cst_35 : f32 to vector<2x96xf32>
    %73 = arith.addf %72, %71 : vector<2x96xf32>
    %74 = arith.divf %72, %73 : vector<2x96xf32>
    %75 = vector.extract_strided_slice %61 {offsets = [0, 96], sizes = [2, 32], strides = [1, 1]} : vector<2x128xf32> to vector<2x32xf32>
    %76 = math.tanh %75 : vector<2x32xf32>
    %77 = vector.extract_strided_slice %68 {offsets = [0, 0], sizes = [2, 96], strides = [1, 1]} : vector<2x128xf32> to vector<2x96xf32>
    %78 = arith.negf %77 : vector<2x96xf32>
    %79 = math.exp %78 : vector<2x96xf32>
    %cst_36 = arith.constant 1.000000e+00 : f32
    %80 = vector.broadcast %cst_36 : f32 to vector<2x96xf32>
    %81 = arith.addf %80, %79 : vector<2x96xf32>
    %82 = arith.divf %80, %81 : vector<2x96xf32>
    %83 = vector.extract_strided_slice %68 {offsets = [0, 96], sizes = [2, 32], strides = [1, 1]} : vector<2x128xf32> to vector<2x32xf32>
    %84 = math.tanh %83 : vector<2x32xf32>
    %85 = vector.extract_strided_slice %74 {offsets = [0, 0], sizes = [2, 32], strides = [1, 1]} : vector<2x96xf32> to vector<2x32xf32>
    %86 = vector.extract_strided_slice %74 {offsets = [0, 32], sizes = [2, 32], strides = [1, 1]} : vector<2x96xf32> to vector<2x32xf32>
    %87 = vector.extract_strided_slice %74 {offsets = [0, 64], sizes = [2, 32], strides = [1, 1]} : vector<2x96xf32> to vector<2x32xf32>
    %88 = vector.extract_strided_slice %82 {offsets = [0, 0], sizes = [2, 32], strides = [1, 1]} : vector<2x96xf32> to vector<2x32xf32>
    %89 = vector.extract_strided_slice %82 {offsets = [0, 32], sizes = [2, 32], strides = [1, 1]} : vector<2x96xf32> to vector<2x32xf32>
    %90 = vector.extract_strided_slice %82 {offsets = [0, 64], sizes = [2, 32], strides = [1, 1]} : vector<2x96xf32> to vector<2x32xf32>
    %91 = arith.mulf %86, %46 : vector<2x32xf32>
    %92 = arith.mulf %85, %76 : vector<2x32xf32>
    %93 = arith.addf %91, %92 : vector<2x32xf32>
    %94 = arith.mulf %89, %49 : vector<2x32xf32>
    %95 = arith.mulf %88, %84 : vector<2x32xf32>
    %96 = arith.addf %94, %95 : vector<2x32xf32>
    %97 = math.tanh %93 : vector<2x32xf32>
    %98 = arith.mulf %87, %97 : vector<2x32xf32>
    %99 = math.tanh %96 : vector<2x32xf32>
    %100 = arith.mulf %90, %99 : vector<2x32xf32>
    %101 = arith.addf %54, %98 : vector<2x32xf32>
    %102 = arith.addf %55, %100 : vector<2x32xf32>
    %c2_i32 = arith.constant 2 : i32
    %103 = arith.index_cast %c2_i32 : i32 to index
    %c0_37 = arith.constant 0 : index
    %c0_38 = arith.constant 0 : index
    %104 = vector.load %arg2[%103, %c0_37, %c0_38] : memref<4x2x128xf32, #tpu.memory_space<vmem>>, vector<1x2x128xf32>
    %105 = vector.shape_cast %104 : vector<1x2x128xf32> to vector<2x128xf32>
    %c0_39 = arith.constant 0 : index
    %c0_40 = arith.constant 0 : index
    %106 = vector.load %arg4[%c0_39, %c0_40] : memref<32x128xf32, #tpu.memory_space<vmem>>, vector<32x128xf32>
    %cst_41 = arith.constant dense<0.000000e+00> : vector<2x128xf32>
    %107 = tpu.matmul %98, %106, %cst_41 {dimension_numbers = #tpu.dot_dimension_numbers<[1], [0], [0], [1], [0, 0, 1, 1], [], []>} : vector<2x32xf32>, vector<32x128xf32>, vector<2x128xf32> -> vector<2x128xf32>
    %108 = arith.addf %105, %107 : vector<2x128xf32>
    %c3_i32_42 = arith.constant 3 : i32
    %109 = arith.subi %c3_i32_42, %c2_i32 : i32
    %110 = arith.index_cast %109 : i32 to index
    %c0_43 = arith.constant 0 : index
    %c0_44 = arith.constant 0 : index
    %111 = vector.load %arg3[%110, %c0_43, %c0_44] : memref<4x2x128xf32, #tpu.memory_space<vmem>>, vector<1x2x128xf32>
    %112 = vector.shape_cast %111 : vector<1x2x128xf32> to vector<2x128xf32>
    %c0_45 = arith.constant 0 : index
    %c0_46 = arith.constant 0 : index
    %113 = vector.load %arg5[%c0_45, %c0_46] : memref<32x128xf32, #tpu.memory_space<vmem>>, vector<32x128xf32>
    %cst_47 = arith.constant dense<0.000000e+00> : vector<2x128xf32>
    %114 = tpu.matmul %100, %113, %cst_47 {dimension_numbers = #tpu.dot_dimension_numbers<[1], [0], [0], [1], [0, 0, 1, 1], [], []>} : vector<2x32xf32>, vector<32x128xf32>, vector<2x128xf32> -> vector<2x128xf32>
    %115 = arith.addf %112, %114 : vector<2x128xf32>
    %116 = vector.extract_strided_slice %108 {offsets = [0, 0], sizes = [2, 96], strides = [1, 1]} : vector<2x128xf32> to vector<2x96xf32>
    %117 = arith.negf %116 : vector<2x96xf32>
    %118 = math.exp %117 : vector<2x96xf32>
    %cst_48 = arith.constant 1.000000e+00 : f32
    %119 = vector.broadcast %cst_48 : f32 to vector<2x96xf32>
    %120 = arith.addf %119, %118 : vector<2x96xf32>
    %121 = arith.divf %119, %120 : vector<2x96xf32>
    %122 = vector.extract_strided_slice %108 {offsets = [0, 96], sizes = [2, 32], strides = [1, 1]} : vector<2x128xf32> to vector<2x32xf32>
    %123 = math.tanh %122 : vector<2x32xf32>
    %124 = vector.extract_strided_slice %115 {offsets = [0, 0], sizes = [2, 96], strides = [1, 1]} : vector<2x128xf32> to vector<2x96xf32>
    %125 = arith.negf %124 : vector<2x96xf32>
    %126 = math.exp %125 : vector<2x96xf32>
    %cst_49 = arith.constant 1.000000e+00 : f32
    %127 = vector.broadcast %cst_49 : f32 to vector<2x96xf32>
    %128 = arith.addf %127, %126 : vector<2x96xf32>
    %129 = arith.divf %127, %128 : vector<2x96xf32>
    %130 = vector.extract_strided_slice %115 {offsets = [0, 96], sizes = [2, 32], strides = [1, 1]} : vector<2x128xf32> to vector<2x32xf32>
    %131 = math.tanh %130 : vector<2x32xf32>
    %132 = vector.extract_strided_slice %121 {offsets = [0, 0], sizes = [2, 32], strides = [1, 1]} : vector<2x96xf32> to vector<2x32xf32>
    %133 = vector.extract_strided_slice %121 {offsets = [0, 32], sizes = [2, 32], strides = [1, 1]} : vector<2x96xf32> to vector<2x32xf32>
    %134 = vector.extract_strided_slice %121 {offsets = [0, 64], sizes = [2, 32], strides = [1, 1]} : vector<2x96xf32> to vector<2x32xf32>
    %135 = vector.extract_strided_slice %129 {offsets = [0, 0], sizes = [2, 32], strides = [1, 1]} : vector<2x96xf32> to vector<2x32xf32>
    %136 = vector.extract_strided_slice %129 {offsets = [0, 32], sizes = [2, 32], strides = [1, 1]} : vector<2x96xf32> to vector<2x32xf32>
    %137 = vector.extract_strided_slice %129 {offsets = [0, 64], sizes = [2, 32], strides = [1, 1]} : vector<2x96xf32> to vector<2x32xf32>
    %138 = arith.mulf %133, %93 : vector<2x32xf32>
    %139 = arith.mulf %132, %123 : vector<2x32xf32>
    %140 = arith.addf %138, %139 : vector<2x32xf32>
    %141 = arith.mulf %136, %96 : vector<2x32xf32>
    %142 = arith.mulf %135, %131 : vector<2x32xf32>
    %143 = arith.addf %141, %142 : vector<2x32xf32>
    %144 = math.tanh %140 : vector<2x32xf32>
    %145 = arith.mulf %134, %144 : vector<2x32xf32>
    %146 = math.tanh %143 : vector<2x32xf32>
    %147 = arith.mulf %137, %146 : vector<2x32xf32>
    %148 = arith.addf %101, %145 : vector<2x32xf32>
    %149 = arith.addf %102, %147 : vector<2x32xf32>
    %c3_i32_50 = arith.constant 3 : i32
    %150 = arith.index_cast %c3_i32_50 : i32 to index
    %c0_51 = arith.constant 0 : index
    %c0_52 = arith.constant 0 : index
    %151 = vector.load %arg2[%150, %c0_51, %c0_52] : memref<4x2x128xf32, #tpu.memory_space<vmem>>, vector<1x2x128xf32>
    %152 = vector.shape_cast %151 : vector<1x2x128xf32> to vector<2x128xf32>
    %c0_53 = arith.constant 0 : index
    %c0_54 = arith.constant 0 : index
    %153 = vector.load %arg4[%c0_53, %c0_54] : memref<32x128xf32, #tpu.memory_space<vmem>>, vector<32x128xf32>
    %cst_55 = arith.constant dense<0.000000e+00> : vector<2x128xf32>
    %154 = tpu.matmul %145, %153, %cst_55 {dimension_numbers = #tpu.dot_dimension_numbers<[1], [0], [0], [1], [0, 0, 1, 1], [], []>} : vector<2x32xf32>, vector<32x128xf32>, vector<2x128xf32> -> vector<2x128xf32>
    %155 = arith.addf %152, %154 : vector<2x128xf32>
    %c3_i32_56 = arith.constant 3 : i32
    %156 = arith.subi %c3_i32_56, %c3_i32_50 : i32
    %157 = arith.index_cast %156 : i32 to index
    %c0_57 = arith.constant 0 : index
    %c0_58 = arith.constant 0 : index
    %158 = vector.load %arg3[%157, %c0_57, %c0_58] : memref<4x2x128xf32, #tpu.memory_space<vmem>>, vector<1x2x128xf32>
    %159 = vector.shape_cast %158 : vector<1x2x128xf32> to vector<2x128xf32>
    %c0_59 = arith.constant 0 : index
    %c0_60 = arith.constant 0 : index
    %160 = vector.load %arg5[%c0_59, %c0_60] : memref<32x128xf32, #tpu.memory_space<vmem>>, vector<32x128xf32>
    %cst_61 = arith.constant dense<0.000000e+00> : vector<2x128xf32>
    %161 = tpu.matmul %147, %160, %cst_61 {dimension_numbers = #tpu.dot_dimension_numbers<[1], [0], [0], [1], [0, 0, 1, 1], [], []>} : vector<2x32xf32>, vector<32x128xf32>, vector<2x128xf32> -> vector<2x128xf32>
    %162 = arith.addf %159, %161 : vector<2x128xf32>
    %163 = vector.extract_strided_slice %155 {offsets = [0, 0], sizes = [2, 96], strides = [1, 1]} : vector<2x128xf32> to vector<2x96xf32>
    %164 = arith.negf %163 : vector<2x96xf32>
    %165 = math.exp %164 : vector<2x96xf32>
    %cst_62 = arith.constant 1.000000e+00 : f32
    %166 = vector.broadcast %cst_62 : f32 to vector<2x96xf32>
    %167 = arith.addf %166, %165 : vector<2x96xf32>
    %168 = arith.divf %166, %167 : vector<2x96xf32>
    %169 = vector.extract_strided_slice %155 {offsets = [0, 96], sizes = [2, 32], strides = [1, 1]} : vector<2x128xf32> to vector<2x32xf32>
    %170 = math.tanh %169 : vector<2x32xf32>
    %171 = vector.extract_strided_slice %162 {offsets = [0, 0], sizes = [2, 96], strides = [1, 1]} : vector<2x128xf32> to vector<2x96xf32>
    %172 = arith.negf %171 : vector<2x96xf32>
    %173 = math.exp %172 : vector<2x96xf32>
    %cst_63 = arith.constant 1.000000e+00 : f32
    %174 = vector.broadcast %cst_63 : f32 to vector<2x96xf32>
    %175 = arith.addf %174, %173 : vector<2x96xf32>
    %176 = arith.divf %174, %175 : vector<2x96xf32>
    %177 = vector.extract_strided_slice %162 {offsets = [0, 96], sizes = [2, 32], strides = [1, 1]} : vector<2x128xf32> to vector<2x32xf32>
    %178 = math.tanh %177 : vector<2x32xf32>
    %179 = vector.extract_strided_slice %168 {offsets = [0, 0], sizes = [2, 32], strides = [1, 1]} : vector<2x96xf32> to vector<2x32xf32>
    %180 = vector.extract_strided_slice %168 {offsets = [0, 32], sizes = [2, 32], strides = [1, 1]} : vector<2x96xf32> to vector<2x32xf32>
    %181 = vector.extract_strided_slice %168 {offsets = [0, 64], sizes = [2, 32], strides = [1, 1]} : vector<2x96xf32> to vector<2x32xf32>
    %182 = vector.extract_strided_slice %176 {offsets = [0, 0], sizes = [2, 32], strides = [1, 1]} : vector<2x96xf32> to vector<2x32xf32>
    %183 = vector.extract_strided_slice %176 {offsets = [0, 32], sizes = [2, 32], strides = [1, 1]} : vector<2x96xf32> to vector<2x32xf32>
    %184 = vector.extract_strided_slice %176 {offsets = [0, 64], sizes = [2, 32], strides = [1, 1]} : vector<2x96xf32> to vector<2x32xf32>
    %185 = arith.mulf %180, %140 : vector<2x32xf32>
    %186 = arith.mulf %179, %170 : vector<2x32xf32>
    %187 = arith.addf %185, %186 : vector<2x32xf32>
    %188 = arith.mulf %183, %143 : vector<2x32xf32>
    %189 = arith.mulf %182, %178 : vector<2x32xf32>
    %190 = arith.addf %188, %189 : vector<2x32xf32>
    %191 = math.tanh %187 : vector<2x32xf32>
    %192 = arith.mulf %181, %191 : vector<2x32xf32>
    %193 = math.tanh %190 : vector<2x32xf32>
    %194 = arith.mulf %184, %193 : vector<2x32xf32>
    %195 = arith.addf %148, %192 : vector<2x32xf32>
    %196 = arith.addf %149, %194 : vector<2x32xf32>
    %c4_i32 = arith.constant 4 : i32
    %c0_64 = arith.constant 0 : index
    %c0_65 = arith.constant 0 : index
    %197 = vector.load %arg9[%c0_64, %c0_65] : memref<2x32xf32, #tpu.memory_space<vmem>>, vector<2x32xf32>
    tpu.vector_store %arg9[%c0_64, %c0_65], %192 {strides = array<i32>} : memref<2x32xf32, #tpu.memory_space<vmem>>, vector<2x32xf32>,
    %c0_66 = arith.constant 0 : index
    %c0_67 = arith.constant 0 : index
    %198 = vector.load %arg10[%c0_66, %c0_67] : memref<2x32xf32, #tpu.memory_space<vmem>>, vector<2x32xf32>
    tpu.vector_store %arg10[%c0_66, %c0_67], %187 {strides = array<i32>} : memref<2x32xf32, #tpu.memory_space<vmem>>, vector<2x32xf32>,
    %c0_68 = arith.constant 0 : index
    %c0_69 = arith.constant 0 : index
    %199 = vector.load %arg11[%c0_68, %c0_69] : memref<2x32xf32, #tpu.memory_space<vmem>>, vector<2x32xf32>
    tpu.vector_store %arg11[%c0_68, %c0_69], %194 {strides = array<i32>} : memref<2x32xf32, #tpu.memory_space<vmem>>, vector<2x32xf32>,
    %c0_70 = arith.constant 0 : index
    %c0_71 = arith.constant 0 : index
    %200 = vector.load %arg12[%c0_70, %c0_71] : memref<2x32xf32, #tpu.memory_space<vmem>>, vector<2x32xf32>
    tpu.vector_store %arg12[%c0_70, %c0_71], %190 {strides = array<i32>} : memref<2x32xf32, #tpu.memory_space<vmem>>, vector<2x32xf32>,
    %c0_72 = arith.constant 0 : index
    %c0_73 = arith.constant 0 : index
    %201 = vector.load %arg13[%c0_72, %c0_73] : memref<2x32xf32, #tpu.memory_space<vmem>>, vector<2x32xf32>
    tpu.vector_store %arg13[%c0_72, %c0_73], %195 {strides = array<i32>} : memref<2x32xf32, #tpu.memory_space<vmem>>, vector<2x32xf32>,
    %c0_74 = arith.constant 0 : index
    %c0_75 = arith.constant 0 : index
    %202 = vector.load %arg14[%c0_74, %c0_75] : memref<2x32xf32, #tpu.memory_space<vmem>>, vector<2x32xf32>
    tpu.vector_store %arg14[%c0_74, %c0_75], %196 {strides = array<i32>} : memref<2x32xf32, #tpu.memory_space<vmem>>, vector<2x32xf32>,
    %c1_i32_76 = arith.constant 1 : i32
    %203 = arith.cmpi eq, %arg1, %c1_i32_76 : i32
    %204 = arith.extui %203 : i1 to i32
    %c0_i32_77 = arith.constant 0 : i32
    %205 = arith.cmpi ne, %204, %c0_i32_77 : i32
    scf.if %205 {
      %c0_78 = arith.constant 0 : index
      %c0_79 = arith.constant 0 : index
      %206 = vector.load %arg6[%c0_78, %c0_79] : memref<64x128xf32, #tpu.memory_space<vmem>>, vector<64x128xf32>
      %cst_80 = arith.constant 1.250000e-01 : f32
      %207 = vector.broadcast %cst_80 : f32 to vector<2x32xf32>
      %208 = arith.mulf %195, %207 : vector<2x32xf32>
      %cst_81 = arith.constant 1.250000e-01 : f32
      %209 = vector.broadcast %cst_81 : f32 to vector<2x32xf32>
      %210 = arith.mulf %196, %209 : vector<2x32xf32>
      %211 = vector.extract_strided_slice %206 {offsets = [0, 0], sizes = [32, 128], strides = [1, 1]} : vector<64x128xf32> to vector<32x128xf32>
      %cst_82 = arith.constant dense<0.000000e+00> : vector<2x128xf32>
      %212 = tpu.matmul %208, %211, %cst_82 {dimension_numbers = #tpu.dot_dimension_numbers<[1], [0], [0], [1], [0, 0, 1, 1], [], []>} : vector<2x32xf32>, vector<32x128xf32>, vector<2x128xf32> -> vector<2x128xf32>
      %213 = vector.extract_strided_slice %206 {offsets = [32, 0], sizes = [32, 128], strides = [1, 1]} : vector<64x128xf32> to vector<32x128xf32>
      %cst_83 = arith.constant dense<0.000000e+00> : vector<2x128xf32>
      %214 = tpu.matmul %210, %213, %cst_83 {dimension_numbers = #tpu.dot_dimension_numbers<[1], [0], [0], [1], [0, 0, 1, 1], [], []>} : vector<2x32xf32>, vector<32x128xf32>, vector<2x128xf32> -> vector<2x128xf32>
      %215 = arith.addf %212, %214 : vector<2x128xf32>
      %c0_84 = arith.constant 0 : index
      %c0_85 = arith.constant 0 : index
      %216 = vector.load %arg7[%c0_84, %c0_85] : memref<1x128xf32, #tpu.memory_space<vmem>>, vector<1x128xf32>
      %217 = vector.broadcast %216 : vector<1x128xf32> to vector<2x128xf32>
      %218 = arith.addf %215, %217 : vector<2x128xf32>
      %c0_86 = arith.constant 0 : index
      %c0_87 = arith.constant 0 : index
      %219 = vector.load %arg8[%c0_86, %c0_87] : memref<2x128xf32, #tpu.memory_space<vmem>>, vector<2x128xf32>
      tpu.vector_store %arg8[%c0_86, %c0_87], %218 {strides = array<i32>} : memref<2x128xf32, #tpu.memory_space<vmem>>, vector<2x128xf32>,
    } else {
    }
    return
  }
  func.func @transform_0(%arg0: i32, %arg1: i32) -> (i32, i32, i32) {
    %c0_i32 = arith.constant 0 : i32
    %c0_i32_0 = arith.constant 0 : i32
    return %arg1, %arg0, %c0_i32 : i32, i32, i32
  }
  func.func @transform_1(%arg0: i32, %arg1: i32) -> (i32, i32, i32) {
    %c1_i32 = arith.constant 1 : i32
    %0 = arith.subi %c1_i32, %arg1 : i32
    %c0_i32 = arith.constant 0 : i32
    %c0_i32_0 = arith.constant 0 : i32
    return %0, %arg0, %c0_i32 : i32, i32, i32
  }
  func.func @transform_2(%arg0: i32, %arg1: i32) -> (i32, i32) {
    %c0_i32 = arith.constant 0 : i32
    %c0_i32_0 = arith.constant 0 : i32
    %c0_i32_1 = arith.constant 0 : i32
    return %c0_i32, %c0_i32_0 : i32, i32
  }
  func.func @transform_3(%arg0: i32, %arg1: i32) -> (i32, i32) {
    %c0_i32 = arith.constant 0 : i32
    %c0_i32_0 = arith.constant 0 : i32
    %c0_i32_1 = arith.constant 0 : i32
    return %c0_i32, %c0_i32_0 : i32, i32
  }
  func.func @transform_4(%arg0: i32, %arg1: i32) -> (i32, i32) {
    %c0_i32 = arith.constant 0 : i32
    %c0_i32_0 = arith.constant 0 : i32
    %c0_i32_1 = arith.constant 0 : i32
    return %c0_i32, %c0_i32_0 : i32, i32
  }
  func.func @transform_5(%arg0: i32, %arg1: i32) -> (i32, i32) {
    %c0_i32 = arith.constant 0 : i32
    %c0_i32_0 = arith.constant 0 : i32
    %c0_i32_1 = arith.constant 0 : i32
    return %c0_i32, %c0_i32_0 : i32, i32
  }
  func.func @transform_6(%arg0: i32, %arg1: i32) -> (i32, i32) {
    %c0_i32 = arith.constant 0 : i32
    %c0_i32_0 = arith.constant 0 : i32
    return %arg0, %c0_i32 : i32, i32
  }
}

</mosaic_0001>

<llo_original>
// kernel: genre_lstm_forward.1
$region0: #{genre_lstm_forward.1}
  #allocation0 [shape = 'u32[]', space=smem, size = 0x4, offset = 0x4, fixed_abs, tag = 'smem constant byte address 0x4 - core index']
  #allocation1 [shape = 'u32[144,128]{1,0:T(1,128)}', space=vmem, size = 0x12000, scoped, tag = 'internal scratch']
  #allocation2 [shape = 'f32[2,32]{1,0:T(2,128)}', space=vmem, size = 0x400, scoped, tag = 'scratch operand']
  #allocation3 [shape = 'f32[2,32]{1,0:T(2,128)}', space=vmem, size = 0x400, scoped, tag = 'scratch operand']
  #allocation4 [shape = 'f32[2,32]{1,0:T(2,128)}', space=vmem, size = 0x400, scoped, tag = 'scratch operand']
  #allocation5 [shape = 'f32[2,32]{1,0:T(2,128)}', space=vmem, size = 0x400, scoped, tag = 'scratch operand']
  #allocation6 [shape = 'f32[2,32]{1,0:T(2,128)}', space=vmem, size = 0x400, scoped, tag = 'scratch operand']
  #allocation7 [shape = 'f32[2,32]{1,0:T(2,128)}', space=vmem, size = 0x400, scoped, tag = 'scratch operand']
  %s0 = inlined_call_operand.vmem [shape: f32[8,2,128], index: 0, kind: input, shape index: {}]
  %s1 = inlined_call_operand.vmem [shape: f32[8,2,128], index: 1, kind: input, shape index: {}]
  %s2 = inlined_call_operand.vmem [shape: f32[32,128], index: 2, kind: input, shape index: {}]
  %s3 = inlined_call_operand.vmem [shape: f32[32,128], index: 3, kind: input, shape index: {}]
  %s4 = inlined_call_operand.vmem [shape: f32[64,128], index: 4, kind: input, shape index: {}]
  %s5 = inlined_call_operand.vmem [shape: f32[1,128], index: 5, kind: input, shape index: {}]
  %s6 = inlined_call_operand.hbm [shape: f32[2,128], index: 6, kind: output, shape index: {}]
  %s7 = sld [smem:[#allocation0]]
  $region65: #{genre_lstm_forward.1} parent=0
    _
  %s9 = ssub.s32 1, %s7
  %s10 = scalar_select 0, %s9, %s7
  $region1: #{genre_lstm_forward.1} parent=0
    #allocation8 [shape = 'u8[1024]{0}', space=vmem, size = 0x400, scoped, tag = 'output window, operand 0, single buffered']
    #allocation9 [shape = 's32[2]{0}', space=sflag, size = 0x8, scoped, tag = 'scoped memory for genre_lstm_forward.1']
    %11 = vsyncpa [#allocation9], 0
    loop: start=0, step=1, limit=4
    $region2: #{genre_lstm_forward.1} parent=1 // loop_pre_header
      _
    $region3: #{genre_lstm_forward.1} parent=1 // loop_header
      %s13 = sphi 0, %s17
      %p14 = scmp.ge.s32.totalorder %s13, 4
      %s20 = sphi 0, %s32
      %s21 = sphi 0, %s28
      %s22 = sphi 0, %s20
      %s23 = sphi 0, %s21
      %s24 = sphi 0, %s22
      %s25 = sphi 0, %s23
      %s37 = sphi 0, %s39
      %s40 = sphi 0, %s37
      %s41 = sphi 0, %s40
      %s57 = sphi 0, %s41
      %s67 = sphi 0, %s69
      %s70 = sphi 0, %s67
      %s71 = sphi 0, %s70
      %s87 = sphi 0, %s71
      %s91 = sphi 0, %s91
      %s93 = sphi 0, %s91
      %s94 = sphi 0, %s93
      %s108 = sphi 0, %s94
      %s112 = sphi 0, %s112
      %s114 = sphi 0, %s112
      %s115 = sphi 0, %s114
      %s129 = sphi 0, %s115
      %s133 = sphi 0, %s133
      %s135 = sphi 0, %s133
      %s136 = sphi 0, %s135
      %s150 = sphi 0, %s136
      %s154 = sphi 0, %s154
      %s156 = sphi 0, %s154
      %s157 = sphi 0, %s156
      %s171 = sphi 0, %s157
      %s177 = sphi 0, %s179
      %s180 = sphi 0, %s177
      %s181 = sphi 0, %s180
      %s197 = sphi 0, %s181
    $region4: #{genre_lstm_forward.1} parent=1 // loop_header_branch
      %16 = sbr.rel (%p14) target = $region8
    $region5: #{genre_lstm_forward.1} parent=1 // loop_body
      %s18 = ssub.s32 %s13, 1
      %s19 = ssub.s32 %s13, 2
      %s26 = sadd.s32 1, %s21
      %p27 = scmp.ge.s32.totalorder %s26, 2
      %s28 = scalar_select %p27, 0, %s26
      %s29 = sadd.s32 1, %s20
      %s30 = scalar_select %p27, %s29, %s20
      %p31 = scmp.ge.s32.totalorder %s30, 1
      %s32 = scalar_select %p31, 0, %s30
      %s33 = ssub.s32 %s21, %s28
      %s34 = ssub.s32 %s20, %s32
      %s35 = sor.u32 %s33, %s34
      %p36 = scmp.eq.s32.totalorder %s35, 0
      %s38 = sadd.s32 %s37, 1
      %s39 = scalar_select %p36, %s37, %s38
      %p42 = pneg %p36
      %p43 = scmp.eq.s32.totalorder %s13, 1
      %p44 = por %p42, %p43
      %p45 = scmp.ne.s32.totalorder %s37, %s40
      %p46 = scmp.eq.s32.totalorder %s13, 0
      %p47 = por %p45, %p46
      %p48 = scmp.ne.s32.totalorder %s37, %s40
      %p49 = scmp.eq.s32.totalorder %s18, 1
      %p50 = por %p48, %p49
      %p51 = scmp.ne.s32.totalorder %s40, %s41
      %p52 = scmp.eq.s32.totalorder %s18, 0
      %p53 = por %p51, %p52
      %p54 = scmp.ne.s32.totalorder %s40, %s41
      %p55 = scmp.eq.s32.totalorder %s19, 1
      %p56 = por %p54, %p55
      %p58 = scmp.ne.s32.totalorder %s41, %s57
      %p59 = scmp.eq.s32.totalorder %s19, 0
      %p60 = por %p58, %p59
      %s61 = ssub.s32 1, %s21
      %s62 = ssub.s32 1, %s28
      %s63 = ssub.s32 %s61, %s62
      %s64 = ssub.s32 %s20, %s32
      %s65 = sor.u32 %s63, %s64
      %p66 = scmp.eq.s32.totalorder %s65, 0
      %s68 = sadd.s32 %s67, 1
      %s69 = scalar_select %p66, %s67, %s68
      %p72 = pneg %p66
      %p73 = scmp.eq.s32.totalorder %s13, 1
      %p74 = por %p72, %p73
      %p75 = scmp.ne.s32.totalorder %s67, %s70
      %p76 = scmp.eq.s32.totalorder %s13, 0
      %p77 = por %p75, %p76
      %p78 = scmp.ne.s32.totalorder %s67, %s70
      %p79 = scmp.eq.s32.totalorder %s18, 1
      %p80 = por %p78, %p79
      %p81 = scmp.ne.s32.totalorder %s70, %s71
      %p82 = scmp.eq.s32.totalorder %s18, 0
      %p83 = por %p81, %p82
      %p84 = scmp.ne.s32.totalorder %s70, %s71
      %p85 = scmp.eq.s32.totalorder %s19, 1
      %p86 = por %p84, %p85
      %p88 = scmp.ne.s32.totalorder %s71, %s87
      %p89 = scmp.eq.s32.totalorder %s19, 0
      %p90 = por %p88, %p89
      %s92 = sadd.s32 %s91, 1
      %p95 = scmp.eq.s32.totalorder %s13, 1
      %p96 = scmp.ne.s32.totalorder %s91, %s93
      %p97 = scmp.eq.s32.totalorder %s13, 0
      %p98 = por %p96, %p97
      %p99 = scmp.ne.s32.totalorder %s91, %s93
      %p100 = scmp.eq.s32.totalorder %s18, 1
      %p101 = por %p99, %p100
      %p102 = scmp.ne.s32.totalorder %s93, %s94
      %p103 = scmp.eq.s32.totalorder %s18, 0
      %p104 = por %p102, %p103
      %p105 = scmp.ne.s32.totalorder %s93, %s94
      %p106 = scmp.eq.s32.totalorder %s19, 1
      %p107 = por %p105, %p106
      %p109 = scmp.ne.s32.totalorder %s94, %s108
      %p110 = scmp.eq.s32.totalorder %s19, 0
      %p111 = por %p109, %p110
      %s113 = sadd.s32 %s112, 1
      %p116 = scmp.eq.s32.totalorder %s13, 1
      %p117 = scmp.ne.s32.totalorder %s112, %s114
      %p118 = scmp.eq.s32.totalorder %s13, 0
      %p119 = por %p117, %p118
      %p120 = scmp.ne.s32.totalorder %s112, %s114
      %p121 = scmp.eq.s32.totalorder %s18, 1
      %p122 = por %p120, %p121
      %p123 = scmp.ne.s32.totalorder %s114, %s115
      %p124 = scmp.eq.s32.totalorder %s18, 0
      %p125 = por %p123, %p124
      %p126 = scmp.ne.s32.totalorder %s114, %s115
      %p127 = scmp.eq.s32.totalorder %s19, 1
      %p128 = por %p126, %p127
      %p130 = scmp.ne.s32.totalorder %s115, %s129
      %p131 = scmp.eq.s32.totalorder %s19, 0
      %p132 = por %p130, %p131
      %s134 = sadd.s32 %s133, 1
      %p137 = scmp.eq.s32.totalorder %s13, 1
      %p138 = scmp.ne.s32.totalorder %s133, %s135
      %p139 = scmp.eq.s32.totalorder %s13, 0
      %p140 = por %p138, %p139
      %p141 = scmp.ne.s32.totalorder %s133, %s135
      %p142 = scmp.eq.s32.totalorder %s18, 1
      %p143 = por %p141, %p142
      %p144 = scmp.ne.s32.totalorder %s135, %s136
      %p145 = scmp.eq.s32.totalorder %s18, 0
      %p146 = por %p144, %p145
      %p147 = scmp.ne.s32.totalorder %s135, %s136
      %p148 = scmp.eq.s32.totalorder %s19, 1
      %p149 = por %p147, %p148
      %p151 = scmp.ne.s32.totalorder %s136, %s150
      %p152 = scmp.eq.s32.totalorder %s19, 0
      %p153 = por %p151, %p152
      %s155 = sadd.s32 %s154, 1
      %p158 = scmp.eq.s32.totalorder %s13, 1
      %p159 = scmp.ne.s32.totalorder %s154, %s156
      %p160 = scmp.eq.s32.totalorder %s13, 0
      %p161 = por %p159, %p160
      %p162 = scmp.ne.s32.totalorder %s154, %s156
      %p163 = scmp.eq.s32.totalorder %s18, 1
      %p164 = por %p162, %p163
      %p165 = scmp.ne.s32.totalorder %s156, %s157
      %p166 = scmp.eq.s32.totalorder %s18, 0
      %p167 = por %p165, %p166
      %p168 = scmp.ne.s32.totalorder %s156, %s157
      %p169 = scmp.eq.s32.totalorder %s19, 1
      %p170 = por %p168, %p169
      %p172 = scmp.ne.s32.totalorder %s157, %s171
      %p173 = scmp.eq.s32.totalorder %s19, 0
      %p174 = por %p172, %p173
      %s175 = ssub.s32 %s20, %s32
      %p176 = scmp.eq.s32.totalorder %s175, 0
      %s178 = sadd.s32 %s177, 1
      %s179 = scalar_select %p176, %s177, %s178
      %p182 = pneg %p176
      %p183 = scmp.eq.s32.totalorder %s13, 1
      %p184 = por %p182, %p183
      %p185 = scmp.ne.s32.totalorder %s177, %s180
      %p186 = scmp.eq.s32.totalorder %s13, 0
      %p187 = por %p185, %p186
      %p188 = scmp.ne.s32.totalorder %s177, %s180
      %p189 = scmp.eq.s32.totalorder %s18, 1
      %p190 = por %p188, %p189
      %p191 = scmp.ne.s32.totalorder %s180, %s181
      %p192 = scmp.eq.s32.totalorder %s18, 0
      %p193 = por %p191, %p192
      %p194 = scmp.ne.s32.totalorder %s180, %s181
      %p195 = scmp.eq.s32.totalorder %s19, 1
      %p196 = por %p194, %p195
      %p198 = scmp.ne.s32.totalorder %s181, %s197
      %p199 = scmp.eq.s32.totalorder %s19, 0
      %p200 = por %p198, %p199
      %p201 = scmp.le.s32.totalorder 1, %s13
      %p202 = scmp.lt.s32.totalorder %s13, 3
      %p203 = pnand %p201, %p202
      %p204 = pneg %p203
      // Predicated region
      $region9: #{genre_lstm_forward.1} parent=5 // pred_check
        _
      $region10: #{genre_lstm_forward.1} parent=5 // pred_check_branch
        %206 = sbr.rel (%p203) target = $region12
      $region11: #{genre_lstm_forward.1} parent=5 // pred_region
        %s207 = ssub.s32 %s13, 1
        // Predicated region
        $region13: #{genre_lstm_forward.1} parent=11 // pred_check
          %p208 = pneg %p104
        $region14: #{genre_lstm_forward.1} parent=11 // pred_check_branch
          %210 = sbr.rel (%p208) target = $region16
        $region15: #{genre_lstm_forward.1} parent=11 // pred_region
          _
        $region16: #{genre_lstm_forward.1} parent=11 // pred_fallthru
          _
        // Predicated region
        $region17: #{genre_lstm_forward.1} parent=11 // pred_check
          %p211 = pneg %p125
        $region18: #{genre_lstm_forward.1} parent=11 // pred_check_branch
          %213 = sbr.rel (%p211) target = $region20
        $region19: #{genre_lstm_forward.1} parent=11 // pred_region
          _
        $region20: #{genre_lstm_forward.1} parent=11 // pred_fallthru
          _
        // Predicated region
        $region21: #{genre_lstm_forward.1} parent=11 // pred_check
          %p214 = pneg %p146
        $region22: #{genre_lstm_forward.1} parent=11 // pred_check_branch
          %216 = sbr.rel (%p214) target = $region24
        $region23: #{genre_lstm_forward.1} parent=11 // pred_region
          _
        $region24: #{genre_lstm_forward.1} parent=11 // pred_fallthru
          _
        // Predicated region
        $region25: #{genre_lstm_forward.1} parent=11 // pred_check
          %p217 = pneg %p167
        $region26: #{genre_lstm_forward.1} parent=11 // pred_check_branch
          %219 = sbr.rel (%p217) target = $region28
        $region27: #{genre_lstm_forward.1} parent=11 // pred_region
          _
        $region28: #{genre_lstm_forward.1} parent=11 // pred_fallthru
          _
      $region12: #{genre_lstm_forward.1} parent=5 // pred_fallthru
        _
      %p220 = scmp.lt.s32.totalorder %s13, 2
      // Predicated region
      $region29: #{genre_lstm_forward.1} parent=5 // pred_check
        %p221 = pneg %p220
      $region30: #{genre_lstm_forward.1} parent=5 // pred_check_branch
        %223 = sbr.rel (%p221) target = $region32
      $region31: #{genre_lstm_forward.1} parent=5 // pred_region
        // Predicated region
        $region33: #{genre_lstm_forward.1} parent=31 // pred_check
          %p224 = pneg %p47
        $region34: #{genre_lstm_forward.1} parent=31 // pred_check_branch
          %226 = sbr.rel (%p224) target = $region36
        $region35: #{genre_lstm_forward.1} parent=31 // pred_region
          %s227 = smul.u32 4, %s21
          %p228 = scmp.lt.s32.totalorder %s227, 7
          %s229 = scalar_select %p228, %s227, 7
          %p230 = scmp.lt.s32.totalorder %s20, 0
          %s231 = scalar_select %p230, %s20, 0
          %s232 = sadd.s32 %s231, %s229
          %s233 = smul.addr %s232, 2
          %s234 = scalar_lea.vmem %s0, %s233
          %s235 = smul.u32 4, %s21
        $region36: #{genre_lstm_forward.1} parent=31 // pred_fallthru
          _
        // Predicated region
        $region37: #{genre_lstm_forward.1} parent=31 // pred_check
          %p236 = pneg %p77
        $region38: #{genre_lstm_forward.1} parent=31 // pred_check_branch
          %238 = sbr.rel (%p236) target = $region40
        $region39: #{genre_lstm_forward.1} parent=31 // pred_region
          %s239 = ssub.s32 1, %s21
          %s240 = smul.u32 4, %s239
          %p241 = scmp.lt.s32.totalorder %s240, 7
          %s242 = scalar_select %p241, %s240, 7
          %p243 = scmp.lt.s32.totalorder %s20, 0
          %s244 = scalar_select %p243, %s20, 0
          %s245 = sadd.s32 %s244, %s242
          %s246 = smul.addr %s245, 2
          %s247 = scalar_lea.vmem %s1, %s246
          %s248 = ssub.s32 1, %s21
          %s249 = smul.u32 4, %s248
        $region40: #{genre_lstm_forward.1} parent=31 // pred_fallthru
          _
      $region32: #{genre_lstm_forward.1} parent=5 // pred_fallthru
        _
      %p250 = scmp.le.s32.totalorder 1, %s13
      %p251 = scmp.lt.s32.totalorder %s13, 3
      %p252 = pnand %p250, %p251
      %p253 = pneg %p252
      // Predicated region
      $region41: #{genre_lstm_forward.1} parent=5 // pred_check
        _
      $region42: #{genre_lstm_forward.1} parent=5 // pred_check_branch
        %255 = sbr.rel (%p252) target = $region44
      $region43: #{genre_lstm_forward.1} parent=5 // pred_region
        %s256 = ssub.s32 %s13, 1
        %s257 = smul.u32 4, %s23
        %p258 = scmp.lt.s32.totalorder %s257, 7
        %s259 = scalar_select %p258, %s257, 7
        %p260 = scmp.lt.s32.totalorder %s22, 0
        %s261 = scalar_select %p260, %s22, 0
        %s262 = sadd.s32 %s261, %s259
        %s263 = smul.addr %s262, 2
        %s264 = scalar_lea.vmem %s0, %s263
        %p265 = pneg %p53
        %p266 = pneg %p50
        %s267 = ssub.s32 1, %s23
        %s268 = smul.u32 4, %s267
        %p269 = scmp.lt.s32.totalorder %s268, 7
        %s270 = scalar_select %p269, %s268, 7
        %p271 = scmp.lt.s32.totalorder %s22, 0
        %s272 = scalar_select %p271, %s22, 0
        %s273 = sadd.s32 %s272, %s270
        %s274 = smul.addr %s273, 2
        %s275 = scalar_lea.vmem %s1, %s274
        %p276 = pneg %p83
        %p277 = pneg %p80
        %p278 = pneg %p104
        %p279 = pneg %p101
        %p280 = pneg %p125
        %p281 = pneg %p122
        %p282 = pneg %p146
        %p283 = pneg %p143
        %p284 = pneg %p167
        %p285 = pneg %p164
        %p286 = pneg %p193
        %p287 = pneg %p190
        %s288 = smul.u32 4, %s23
        %p289 = scmp.lt.s32.totalorder %s288, 7
        %s290 = scalar_select %p289, %s288, 7
        %p291 = scmp.lt.s32.totalorder %s22, 0
        %s292 = scalar_select %p291, %s22, 0
        %s293 = sadd.s32 %s292, %s290
        %s294 = smul.addr %s293, 2
        %s295 = scalar_lea.vmem %s0, %s294
        %s296 = smul.u32 4, %s23
        %s297 = ssub.s32 1, %s23
        %s298 = smul.u32 4, %s297
        %p299 = scmp.lt.s32.totalorder %s298, 7
        %s300 = scalar_select %p299, %s298, 7
        %p301 = scmp.lt.s32.totalorder %s22, 0
        %s302 = scalar_select %p301, %s22, 0
        %s303 = sadd.s32 %s302, %s300
        %s304 = smul.addr %s303, 2
        %s305 = scalar_lea.vmem %s1, %s304
        %s306 = ssub.s32 1, %s23
        %s307 = smul.u32 4, %s306
        %p308 = scmp.eq.s32.totalorder %s23, 0
        // Predicated region
        $region45: #{genre_lstm_forward.1} parent=43 // pred_check
          %p309 = pneg %p308
        $region46: #{genre_lstm_forward.1} parent=43 // pred_check_branch
          %311 = sbr.rel (%p309) target = $region48
        $region47: #{genre_lstm_forward.1} parent=43 // pred_region
          %vm312 = vcmask 254976
          %313 = vst.msk [vmem:[#allocation2] sm:$0x3] %vm312, 0.0
          %314 = vst.msk [vmem:[#allocation3] sm:$0x3] %vm312, 0.0
          %315 = vst.msk [vmem:[#allocation4] sm:$0x3] %vm312, 0.0
          %316 = vst.msk [vmem:[#allocation5] sm:$0x3] %vm312, 0.0
          %317 = vst.msk [vmem:[#allocation6] sm:$0x3] %vm312, 0.0
          %318 = vst.msk [vmem:[#allocation7] sm:$0x3] %vm312, 0.0
        $region48: #{genre_lstm_forward.1} parent=43 // pred_fallthru
          _
        %v319 = vld [vmem:[#allocation2] sm:$0x3]
        %v320 = vld [vmem:[#allocation3] sm:$0x3]
        %v321 = vld [vmem:[#allocation4] sm:$0x3]
        %v322 = vld [vmem:[#allocation5] sm:$0x3]
        %v323 = vld [vmem:[#allocation6] sm:$0x3]
        %v324 = vld [vmem:[#allocation7] sm:$0x3]
        %v325 = vld [vmem:[%s295] sm:$0x3]
        %v326 = vld [vmem:[%s2] sm:$0xff]
        %v327 = vld [vmem:[%s2 + $0x8] sm:$0xff]
        %v328 = vld [vmem:[%s2 + $0x10] sm:$0xff]
        %v329 = vld [vmem:[%s2 + $0x18] sm:$0xff]
        %vm330 = vcmask 261120
        %v332 = vsel %vm330, %v319, 0
        %334 = vmatprep.subr.mxu0 0.0
        %335 = vmatpush1.msra.mxu0 %v326
        %336 = vmatprep.subr.mxu0 0.0
        %337 = vmatpush1.msra.mxu0 %v327
        %338 = vmatprep.subr.mxu0 0.0
        %339 = vmatpush1.msra.mxu0 %v328
        %340 = vmatprep.subr.mxu0 0.0
        %341 = vmatpush1.msra.mxu0 %v329
        %342 = vmatprep.subr.mxu0 0.0
        %343 = vmatpush1.msra.mxu0 0.0
        %344 = vmatprep.subr.mxu0 0.0
        %345 = vmatpush1.msra.mxu0 0.0
        %346 = vmatprep.subr.mxu0 0.0
        %347 = vmatpush1.msra.mxu0 0.0
        %348 = vmatprep.subr.mxu0 0.0
        %349 = vmatpush1.msra.mxu0 0.0
        %350 = vmatprep.subr.mxu0 0.0
        %351 = vmatpush1.msra.mxu0 0.0
        %352 = vmatprep.subr.mxu0 0.0
        %353 = vmatpush1.msra.mxu0 0.0
        %354 = vmatprep.subr.mxu0 0.0
        %355 = vmatpush1.msra.mxu0 0.0
        %356 = vmatprep.subr.mxu0 0.0
        %357 = vmatpush1.msra.mxu0 0.0
        %358 = vmatprep.subr.mxu0 0.0
        %359 = vmatpush1.msra.mxu0 0.0
        %360 = vmatprep.subr.mxu0 0.0
        %361 = vmatpush1.msra.mxu0 0.0
        %362 = vmatprep.subr.mxu0 0.0
        %363 = vmatpush1.msra.mxu0 0.0
        %364 = vmatprep.subr.mxu0 0.0
        %365 = vmatpush1.msra.mxu0 0.0
        %366 = vmatprep.subr.mxu0 0.0
        %367 = vmatpush1.msra.mxu0 0.0
        %368 = vmatprep.subr.mxu0 0.0
        %369 = vmatpush1.msra.mxu0 0.0
        %370 = vmatprep.subr.mxu0 0.0
        %371 = vmatpush1.msra.mxu0 0.0
        %372 = vmatprep.subr.mxu0 0.0
        %373 = vmatpush1.msra.mxu0 0.0
        %374 = vmatprep.subr.mxu0 0.0
        %375 = vmatpush1.msra.mxu0 0.0
        %376 = vmatprep.subr.mxu0 0.0
        %377 = vmatpush1.msra.mxu0 0.0
        %378 = vmatprep.subr.mxu0 0.0
        %379 = vmatpush1.msra.mxu0 0.0
        %380 = vmatprep.subr.mxu0 0.0
        %381 = vmatpush1.msra.mxu0 0.0
        %382 = vmatprep.subr.mxu0 0.0
        %383 = vmatpush1.msra.mxu0 0.0
        %384 = vmatprep.subr.mxu0 0.0
        %385 = vmatpush1.msra.mxu0 0.0
        %386 = vmatprep.subr.mxu0 0.0
        %387 = vmatpush1.msra.mxu0 0.0
        %388 = vmatprep.subr.mxu0 0.0
        %389 = vmatpush1.msra.mxu0 0.0
        %390 = vmatprep.subr.mxu0 0.0
        %391 = vmatpush1.msra.mxu0 0.0
        %392 = vmatprep.subr.mxu0 0.0
        %393 = vmatpush1.msra.mxu0 0.0
        %394 = vmatprep.subr.mxu0 0.0
        %395 = vmatpush1.msra.mxu0 0.0
        %396 = vmatprep.subr.mxu0 0.0
        %397 = vmatpush1.msra.mxu0 0.0
        %398 = vmatprep.mubr.f32.mxu0 0.0
        %399 = vmatmul.mubr.f32.gmra.mrb[0].mxu0 %v332
        %v400 = vpop.f32.mrb[0].mxu0
        %v401 = vadd.f32 0.0, %v400
        %v402 = vpop.f32.mrb[0].mxu0
        %403 = vdwg.mxu0
        %v404 = vadd.f32 %v325, %v401
        %s405 = scalar_lea.vmem %s305, 6
        %v406 = vld [vmem:[%s405] sm:$0x3]
        %v407 = vld [vmem:[%s3] sm:$0xff]
        %v408 = vld [vmem:[%s3 + $0x8] sm:$0xff]
        %v409 = vld [vmem:[%s3 + $0x10] sm:$0xff]
        %v410 = vld [vmem:[%s3 + $0x18] sm:$0xff]
        %v412 = vsel %vm330, %v321, 0
        %414 = vmatprep.subr.mxu0 0.0
        %415 = vmatpush1.msra.mxu0 %v407
        %416 = vmatprep.subr.mxu0 0.0
        %417 = vmatpush1.msra.mxu0 %v408
        %418 = vmatprep.subr.mxu0 0.0
        %419 = vmatpush1.msra.mxu0 %v409
        %420 = vmatprep.subr.mxu0 0.0
        %421 = vmatpush1.msra.mxu0 %v410
        %422 = vmatprep.subr.mxu0 0.0
        %423 = vmatpush1.msra.mxu0 0.0
        %424 = vmatprep.subr.mxu0 0.0
        %425 = vmatpush1.msra.mxu0 0.0
        %426 = vmatprep.subr.mxu0 0.0
        %427 = vmatpush1.msra.mxu0 0.0
        %428 = vmatprep.subr.mxu0 0.0
        %429 = vmatpush1.msra.mxu0 0.0
        %430 = vmatprep.subr.mxu0 0.0
        %431 = vmatpush1.msra.mxu0 0.0
        %432 = vmatprep.subr.mxu0 0.0
        %433 = vmatpush1.msra.mxu0 0.0
        %434 = vmatprep.subr.mxu0 0.0
        %435 = vmatpush1.msra.mxu0 0.0
        %436 = vmatprep.subr.mxu0 0.0
        %437 = vmatpush1.msra.mxu0 0.0
        %438 = vmatprep.subr.mxu0 0.0
        %439 = vmatpush1.msra.mxu0 0.0
        %440 = vmatprep.subr.mxu0 0.0
        %441 = vmatpush1.msra.mxu0 0.0
        %442 = vmatprep.subr.mxu0 0.0
        %443 = vmatpush1.msra.mxu0 0.0
        %444 = vmatprep.subr.mxu0 0.0
        %445 = vmatpush1.msra.mxu0 0.0
        %446 = vmatprep.subr.mxu0 0.0
        %447 = vmatpush1.msra.mxu0 0.0
        %448 = vmatprep.subr.mxu0 0.0
        %449 = vmatpush1.msra.mxu0 0.0
        %450 = vmatprep.subr.mxu0 0.0
        %451 = vmatpush1.msra.mxu0 0.0
        %452 = vmatprep.subr.mxu0 0.0
        %453 = vmatpush1.msra.mxu0 0.0
        %454 = vmatprep.subr.mxu0 0.0
        %455 = vmatpush1.msra.mxu0 0.0
        %456 = vmatprep.subr.mxu0 0.0
        %457 = vmatpush1.msra.mxu0 0.0
        %458 = vmatprep.subr.mxu0 0.0
        %459 = vmatpush1.msra.mxu0 0.0
        %460 = vmatprep.subr.mxu0 0.0
        %461 = vmatpush1.msra.mxu0 0.0
        %462 = vmatprep.subr.mxu0 0.0
        %463 = vmatpush1.msra.mxu0 0.0
        %464 = vmatprep.subr.mxu0 0.0
        %465 = vmatpush1.msra.mxu0 0.0
        %466 = vmatprep.subr.mxu0 0.0
        %467 = vmatpush1.msra.mxu0 0.0
        %468 = vmatprep.subr.mxu0 0.0
        %469 = vmatpush1.msra.mxu0 0.0
        %470 = vmatprep.subr.mxu0 0.0
        %471 = vmatpush1.msra.mxu0 0.0
        %472 = vmatprep.subr.mxu0 0.0
        %473 = vmatpush1.msra.mxu0 0.0
        %474 = vmatprep.subr.mxu0 0.0
        %475 = vmatpush1.msra.mxu0 0.0
        %476 = vmatprep.subr.mxu0 0.0
        %477 = vmatpush1.msra.mxu0 0.0
        %478 = vmatprep.mubr.f32.mxu0 0.0
        %479 = vmatmul.mubr.f32.gmra.mrb[0].mxu0 %v412
        %v480 = vpop.f32.mrb[0].mxu0
        %v481 = vadd.f32 0.0, %v480
        %v482 = vpop.f32.mrb[0].mxu0
        %483 = vdwg.mxu0
        %v484 = vadd.f32 %v406, %v481
        %v485 = vxor.u32 %v404, 2147483648
        %v486 = vmul.f32 %v485, 1.442695
        %v487 = vpow.pop %v486
        %v488 = vadd.f32 %v487, 1.0
        %v489 = vrcp.pop %v488
        %v490 = vmul.f32 1.0, %v489
        %v491 = vtanh.pop %v404
        %v492 = vxor.u32 %v484, 2147483648
        %v493 = vmul.f32 %v492, 1.442695
        %v494 = vpow.pop %v493
        %v495 = vadd.f32 %v494, 1.0
        %v496 = vrcp.pop %v495
        %v497 = vmul.f32 1.0, %v496
        %v498 = vtanh.pop %v484
        %500 = vrot.lane.b32.xlu0 %v320, 32
        %v501 = vpop.permute.xlu0 %500
        %v503 = vmul.f32 %v490, %v501
        %505 = vrot.lane.b32.xlu0 %v491, 32
        %v506 = vpop.permute.xlu0 %505
        %v508 = vmul.f32 %v490, %v506
        %510 = vrot.lane.b32.xlu0 %v508, 32
        %v511 = vpop.permute.xlu0 %510
        %v513 = vadd.f32 %v503, %v511
        %515 = vrot.lane.b32.xlu0 %v322, 32
        %v516 = vpop.permute.xlu0 %515
        %v518 = vmul.f32 %v497, %v516
        %520 = vrot.lane.b32.xlu0 %v498, 32
        %v521 = vpop.permute.xlu0 %520
        %v523 = vmul.f32 %v497, %v521
        %525 = vrot.lane.b32.xlu0 %v523, 32
        %v526 = vpop.permute.xlu0 %525
        %v528 = vadd.f32 %v518, %v526
        %v529 = vtanh.pop %v513
        %531 = vrot.lane.b32.xlu0 %v529, 32
        %v532 = vpop.permute.xlu0 %531
        %v534 = vmul.f32 %v490, %v532
        %v535 = vtanh.pop %v528
        %537 = vrot.lane.b32.xlu0 %v535, 32
        %v538 = vpop.permute.xlu0 %537
        %v540 = vmul.f32 %v497, %v538
        %542 = vrot.lane.b32.xlu0 %v534, 64
        %v543 = vpop.permute.xlu0 %542
        %v545 = vadd.f32 %v323, %v543
        %547 = vrot.lane.b32.xlu0 %v540, 64
        %v548 = vpop.permute.xlu0 %547
        %v550 = vadd.f32 %v324, %v548
        %s551 = scalar_lea.vmem %s295, 2
        %v552 = vld [vmem:[%s551] sm:$0x3]
        %v553 = vsel %vm330, %v543, 0
        %555 = vmatprep.subr.mxu0 0.0
        %556 = vmatpush1.msra.mxu0 %v326
        %557 = vmatprep.subr.mxu0 0.0
        %558 = vmatpush1.msra.mxu0 %v327
        %559 = vmatprep.subr.mxu0 0.0
        %560 = vmatpush1.msra.mxu0 %v328
        %561 = vmatprep.subr.mxu0 0.0
        %562 = vmatpush1.msra.mxu0 %v329
        %563 = vmatprep.subr.mxu0 0.0
        %564 = vmatpush1.msra.mxu0 0.0
        %565 = vmatprep.subr.mxu0 0.0
        %566 = vmatpush1.msra.mxu0 0.0
        %567 = vmatprep.subr.mxu0 0.0
        %568 = vmatpush1.msra.mxu0 0.0
        %569 = vmatprep.subr.mxu0 0.0
        %570 = vmatpush1.msra.mxu0 0.0
        %571 = vmatprep.subr.mxu0 0.0
        %572 = vmatpush1.msra.mxu0 0.0
        %573 = vmatprep.subr.mxu0 0.0
        %574 = vmatpush1.msra.mxu0 0.0
        %575 = vmatprep.subr.mxu0 0.0
        %576 = vmatpush1.msra.mxu0 0.0
        %577 = vmatprep.subr.mxu0 0.0
        %578 = vmatpush1.msra.mxu0 0.0
        %579 = vmatprep.subr.mxu0 0.0
        %580 = vmatpush1.msra.mxu0 0.0
        %581 = vmatprep.subr.mxu0 0.0
        %582 = vmatpush1.msra.mxu0 0.0
        %583 = vmatprep.subr.mxu0 0.0
        %584 = vmatpush1.msra.mxu0 0.0
        %585 = vmatprep.subr.mxu0 0.0
        %586 = vmatpush1.msra.mxu0 0.0
        %587 = vmatprep.subr.mxu0 0.0
        %588 = vmatpush1.msra.mxu0 0.0
        %589 = vmatprep.subr.mxu0 0.0
        %590 = vmatpush1.msra.mxu0 0.0
        %591 = vmatprep.subr.mxu0 0.0
        %592 = vmatpush1.msra.mxu0 0.0
        %593 = vmatprep.subr.mxu0 0.0
        %594 = vmatpush1.msra.mxu0 0.0
        %595 = vmatprep.subr.mxu0 0.0
        %596 = vmatpush1.msra.mxu0 0.0
        %597 = vmatprep.subr.mxu0 0.0
        %598 = vmatpush1.msra.mxu0 0.0
        %599 = vmatprep.subr.mxu0 0.0
        %600 = vmatpush1.msra.mxu0 0.0
        %601 = vmatprep.subr.mxu0 0.0
        %602 = vmatpush1.msra.mxu0 0.0
        %603 = vmatprep.subr.mxu0 0.0
        %604 = vmatpush1.msra.mxu0 0.0
        %605 = vmatprep.subr.mxu0 0.0
        %606 = vmatpush1.msra.mxu0 0.0
        %607 = vmatprep.subr.mxu0 0.0
        %608 = vmatpush1.msra.mxu0 0.0
        %609 = vmatprep.subr.mxu0 0.0
        %610 = vmatpush1.msra.mxu0 0.0
        %611 = vmatprep.subr.mxu0 0.0
        %612 = vmatpush1.msra.mxu0 0.0
        %613 = vmatprep.subr.mxu0 0.0
        %614 = vmatpush1.msra.mxu0 0.0
        %615 = vmatprep.subr.mxu0 0.0
        %616 = vmatpush1.msra.mxu0 0.0
        %617 = vmatprep.subr.mxu0 0.0
        %618 = vmatpush1.msra.mxu0 0.0
        %619 = vmatprep.mubr.f32.mxu0 0.0
        %620 = vmatmul.mubr.f32.gmra.mrb[0].mxu0 %v553
        %v621 = vpop.f32.mrb[0].mxu0
        %v622 = vadd.f32 0.0, %v621
        %v623 = vpop.f32.mrb[0].mxu0
        %624 = vdwg.mxu0
        %v625 = vadd.f32 %v552, %v622
        %s626 = scalar_lea.vmem %s305, 4
        %v627 = vld [vmem:[%s626] sm:$0x3]
        %v628 = vsel %vm330, %v548, 0
        %630 = vmatprep.subr.mxu0 0.0
        %631 = vmatpush1.msra.mxu0 %v407
        %632 = vmatprep.subr.mxu0 0.0
        %633 = vmatpush1.msra.mxu0 %v408
        %634 = vmatprep.subr.mxu0 0.0
        %635 = vmatpush1.msra.mxu0 %v409
        %636 = vmatprep.subr.mxu0 0.0
        %637 = vmatpush1.msra.mxu0 %v410
        %638 = vmatprep.subr.mxu0 0.0
        %639 = vmatpush1.msra.mxu0 0.0
        %640 = vmatprep.subr.mxu0 0.0
        %641 = vmatpush1.msra.mxu0 0.0
        %642 = vmatprep.subr.mxu0 0.0
        %643 = vmatpush1.msra.mxu0 0.0
        %644 = vmatprep.subr.mxu0 0.0
        %645 = vmatpush1.msra.mxu0 0.0
        %646 = vmatprep.subr.mxu0 0.0
        %647 = vmatpush1.msra.mxu0 0.0
        %648 = vmatprep.subr.mxu0 0.0
        %649 = vmatpush1.msra.mxu0 0.0
        %650 = vmatprep.subr.mxu0 0.0
        %651 = vmatpush1.msra.mxu0 0.0
        %652 = vmatprep.subr.mxu0 0.0
        %653 = vmatpush1.msra.mxu0 0.0
        %654 = vmatprep.subr.mxu0 0.0
        %655 = vmatpush1.msra.mxu0 0.0
        %656 = vmatprep.subr.mxu0 0.0
        %657 = vmatpush1.msra.mxu0 0.0
        %658 = vmatprep.subr.mxu0 0.0
        %659 = vmatpush1.msra.mxu0 0.0
        %660 = vmatprep.subr.mxu0 0.0
        %661 = vmatpush1.msra.mxu0 0.0
        %662 = vmatprep.subr.mxu0 0.0
        %663 = vmatpush1.msra.mxu0 0.0
        %664 = vmatprep.subr.mxu0 0.0
        %665 = vmatpush1.msra.mxu0 0.0
        %666 = vmatprep.subr.mxu0 0.0
        %667 = vmatpush1.msra.mxu0 0.0
        %668 = vmatprep.subr.mxu0 0.0
        %669 = vmatpush1.msra.mxu0 0.0
        %670 = vmatprep.subr.mxu0 0.0
        %671 = vmatpush1.msra.mxu0 0.0
        %672 = vmatprep.subr.mxu0 0.0
        %673 = vmatpush1.msra.mxu0 0.0
        %674 = vmatprep.subr.mxu0 0.0
        %675 = vmatpush1.msra.mxu0 0.0
        %676 = vmatprep.subr.mxu0 0.0
        %677 = vmatpush1.msra.mxu0 0.0
        %678 = vmatprep.subr.mxu0 0.0
        %679 = vmatpush1.msra.mxu0 0.0
        %680 = vmatprep.subr.mxu0 0.0
        %681 = vmatpush1.msra.mxu0 0.0
        %682 = vmatprep.subr.mxu0 0.0
        %683 = vmatpush1.msra.mxu0 0.0
        %684 = vmatprep.subr.mxu0 0.0
        %685 = vmatpush1.msra.mxu0 0.0
        %686 = vmatprep.subr.mxu0 0.0
        %687 = vmatpush1.msra.mxu0 0.0
        %688 = vmatprep.subr.mxu0 0.0
        %689 = vmatpush1.msra.mxu0 0.0
        %690 = vmatprep.subr.mxu0 0.0
        %691 = vmatpush1.msra.mxu0 0.0
        %692 = vmatprep.subr.mxu0 0.0
        %693 = vmatpush1.msra.mxu0 0.0
        %694 = vmatprep.mubr.f32.mxu0 0.0
        %695 = vmatmul.mubr.f32.gmra.mrb[0].mxu0 %v628
        %v696 = vpop.f32.mrb[0].mxu0
        %v697 = vadd.f32 0.0, %v696
        %v698 = vpop.f32.mrb[0].mxu0
        %699 = vdwg.mxu0
        %v700 = vadd.f32 %v627, %v697
        %v701 = vxor.u32 %v625, 2147483648
        %v702 = vmul.f32 %v701, 1.442695
        %v703 = vpow.pop %v702
        %v704 = vadd.f32 %v703, 1.0
        %v705 = vrcp.pop %v704
        %v706 = vmul.f32 1.0, %v705
        %v707 = vtanh.pop %v625
        %v708 = vxor.u32 %v700, 2147483648
        %v709 = vmul.f32 %v708, 1.442695
        %v710 = vpow.pop %v709
        %v711 = vadd.f32 %v710, 1.0
        %v712 = vrcp.pop %v711
        %v713 = vmul.f32 1.0, %v712
        %v714 = vtanh.pop %v700
        %v715 = vmul.f32 %v706, %v513
        %717 = vrot.lane.b32.xlu0 %v707, 32
        %v718 = vpop.permute.xlu0 %717
        %v720 = vmul.f32 %v706, %v718
        %722 = vrot.lane.b32.xlu0 %v720, 32
        %v723 = vpop.permute.xlu0 %722
        %v725 = vadd.f32 %v715, %v723
        %v726 = vmul.f32 %v713, %v528
        %728 = vrot.lane.b32.xlu0 %v714, 32
        %v729 = vpop.permute.xlu0 %728
        %v731 = vmul.f32 %v713, %v729
        %733 = vrot.lane.b32.xlu0 %v731, 32
        %v734 = vpop.permute.xlu0 %733
        %v736 = vadd.f32 %v726, %v734
        %v737 = vtanh.pop %v725
        %739 = vrot.lane.b32.xlu0 %v737, 32
        %v740 = vpop.permute.xlu0 %739
        %v742 = vmul.f32 %v706, %v740
        %v743 = vtanh.pop %v736
        %745 = vrot.lane.b32.xlu0 %v743, 32
        %v746 = vpop.permute.xlu0 %745
        %v748 = vmul.f32 %v713, %v746
        %750 = vrot.lane.b32.xlu0 %v742, 64
        %v751 = vpop.permute.xlu0 %750
        %v753 = vadd.f32 %v545, %v751
        %755 = vrot.lane.b32.xlu0 %v748, 64
        %v756 = vpop.permute.xlu0 %755
        %v758 = vadd.f32 %v550, %v756
        %s759 = scalar_lea.vmem %s295, 4
        %v760 = vld [vmem:[%s759] sm:$0x3]
        %v761 = vsel %vm330, %v751, 0
        %763 = vmatprep.subr.mxu0 0.0
        %764 = vmatpush1.msra.mxu0 %v326
        %765 = vmatprep.subr.mxu0 0.0
        %766 = vmatpush1.msra.mxu0 %v327
        %767 = vmatprep.subr.mxu0 0.0
        %768 = vmatpush1.msra.mxu0 %v328
        %769 = vmatprep.subr.mxu0 0.0
        %770 = vmatpush1.msra.mxu0 %v329
        %771 = vmatprep.subr.mxu0 0.0
        %772 = vmatpush1.msra.mxu0 0.0
        %773 = vmatprep.subr.mxu0 0.0
        %774 = vmatpush1.msra.mxu0 0.0
        %775 = vmatprep.subr.mxu0 0.0
        %776 = vmatpush1.msra.mxu0 0.0
        %777 = vmatprep.subr.mxu0 0.0
        %778 = vmatpush1.msra.mxu0 0.0
        %779 = vmatprep.subr.mxu0 0.0
        %780 = vmatpush1.msra.mxu0 0.0
        %781 = vmatprep.subr.mxu0 0.0
        %782 = vmatpush1.msra.mxu0 0.0
        %783 = vmatprep.subr.mxu0 0.0
        %784 = vmatpush1.msra.mxu0 0.0
        %785 = vmatprep.subr.mxu0 0.0
        %786 = vmatpush1.msra.mxu0 0.0
        %787 = vmatprep.subr.mxu0 0.0
        %788 = vmatpush1.msra.mxu0 0.0
        %789 = vmatprep.subr.mxu0 0.0
        %790 = vmatpush1.msra.mxu0 0.0
        %791 = vmatprep.subr.mxu0 0.0
        %792 = vmatpush1.msra.mxu0 0.0
        %793 = vmatprep.subr.mxu0 0.0
        %794 = vmatpush1.msra.mxu0 0.0
        %795 = vmatprep.subr.mxu0 0.0
        %796 = vmatpush1.msra.mxu0 0.0
        %797 = vmatprep.subr.mxu0 0.0
        %798 = vmatpush1.msra.mxu0 0.0
        %799 = vmatprep.subr.mxu0 0.0
        %800 = vmatpush1.msra.mxu0 0.0
        %801 = vmatprep.subr.mxu0 0.0
        %802 = vmatpush1.msra.mxu0 0.0
        %803 = vmatprep.subr.mxu0 0.0
        %804 = vmatpush1.msra.mxu0 0.0
        %805 = vmatprep.subr.mxu0 0.0
        %806 = vmatpush1.msra.mxu0 0.0
        %807 = vmatprep.subr.mxu0 0.0
        %808 = vmatpush1.msra.mxu0 0.0
        %809 = vmatprep.subr.mxu0 0.0
        %810 = vmatpush1.msra.mxu0 0.0
        %811 = vmatprep.subr.mxu0 0.0
        %812 = vmatpush1.msra.mxu0 0.0
        %813 = vmatprep.subr.mxu0 0.0
        %814 = vmatpush1.msra.mxu0 0.0
        %815 = vmatprep.subr.mxu0 0.0
        %816 = vmatpush1.msra.mxu0 0.0
        %817 = vmatprep.subr.mxu0 0.0
        %818 = vmatpush1.msra.mxu0 0.0
        %819 = vmatprep.subr.mxu0 0.0
        %820 = vmatpush1.msra.mxu0 0.0
        %821 = vmatprep.subr.mxu0 0.0
        %822 = vmatpush1.msra.mxu0 0.0
        %823 = vmatprep.subr.mxu0 0.0
        %824 = vmatpush1.msra.mxu0 0.0
        %825 = vmatprep.subr.mxu0 0.0
        %826 = vmatpush1.msra.mxu0 0.0
        %827 = vmatprep.mubr.f32.mxu0 0.0
        %828 = vmatmul.mubr.f32.gmra.mrb[0].mxu0 %v761
        %v829 = vpop.f32.mrb[0].mxu0
        %v830 = vadd.f32 0.0, %v829
        %v831 = vpop.f32.mrb[0].mxu0
        %832 = vdwg.mxu0
        %v833 = vadd.f32 %v760, %v830
        %s834 = scalar_lea.vmem %s305, 2
        %v835 = vld [vmem:[%s834] sm:$0x3]
        %v836 = vsel %vm330, %v756, 0
        %838 = vmatprep.subr.mxu0 0.0
        %839 = vmatpush1.msra.mxu0 %v407
        %840 = vmatprep.subr.mxu0 0.0
        %841 = vmatpush1.msra.mxu0 %v408
        %842 = vmatprep.subr.mxu0 0.0
        %843 = vmatpush1.msra.mxu0 %v409
        %844 = vmatprep.subr.mxu0 0.0
        %845 = vmatpush1.msra.mxu0 %v410
        %846 = vmatprep.subr.mxu0 0.0
        %847 = vmatpush1.msra.mxu0 0.0
        %848 = vmatprep.subr.mxu0 0.0
        %849 = vmatpush1.msra.mxu0 0.0
        %850 = vmatprep.subr.mxu0 0.0
        %851 = vmatpush1.msra.mxu0 0.0
        %852 = vmatprep.subr.mxu0 0.0
        %853 = vmatpush1.msra.mxu0 0.0
        %854 = vmatprep.subr.mxu0 0.0
        %855 = vmatpush1.msra.mxu0 0.0
        %856 = vmatprep.subr.mxu0 0.0
        %857 = vmatpush1.msra.mxu0 0.0
        %858 = vmatprep.subr.mxu0 0.0
        %859 = vmatpush1.msra.mxu0 0.0
        %860 = vmatprep.subr.mxu0 0.0
        %861 = vmatpush1.msra.mxu0 0.0
        %862 = vmatprep.subr.mxu0 0.0
        %863 = vmatpush1.msra.mxu0 0.0
        %864 = vmatprep.subr.mxu0 0.0
        %865 = vmatpush1.msra.mxu0 0.0
        %866 = vmatprep.subr.mxu0 0.0
        %867 = vmatpush1.msra.mxu0 0.0
        %868 = vmatprep.subr.mxu0 0.0
        %869 = vmatpush1.msra.mxu0 0.0
        %870 = vmatprep.subr.mxu0 0.0
        %871 = vmatpush1.msra.mxu0 0.0
        %872 = vmatprep.subr.mxu0 0.0
        %873 = vmatpush1.msra.mxu0 0.0
        %874 = vmatprep.subr.mxu0 0.0
        %875 = vmatpush1.msra.mxu0 0.0
        %876 = vmatprep.subr.mxu0 0.0
        %877 = vmatpush1.msra.mxu0 0.0
        %878 = vmatprep.subr.mxu0 0.0
        %879 = vmatpush1.msra.mxu0 0.0
        %880 = vmatprep.subr.mxu0 0.0
        %881 = vmatpush1.msra.mxu0 0.0
        %882 = vmatprep.subr.mxu0 0.0
        %883 = vmatpush1.msra.mxu0 0.0
        %884 = vmatprep.subr.mxu0 0.0
        %885 = vmatpush1.msra.mxu0 0.0
        %886 = vmatprep.subr.mxu0 0.0
        %887 = vmatpush1.msra.mxu0 0.0
        %888 = vmatprep.subr.mxu0 0.0
        %889 = vmatpush1.msra.mxu0 0.0
        %890 = vmatprep.subr.mxu0 0.0
        %891 = vmatpush1.msra.mxu0 0.0
        %892 = vmatprep.subr.mxu0 0.0
        %893 = vmatpush1.msra.mxu0 0.0
        %894 = vmatprep.subr.mxu0 0.0
        %895 = vmatpush1.msra.mxu0 0.0
        %896 = vmatprep.subr.mxu0 0.0
        %897 = vmatpush1.msra.mxu0 0.0
        %898 = vmatprep.subr.mxu0 0.0
        %899 = vmatpush1.msra.mxu0 0.0
        %900 = vmatprep.subr.mxu0 0.0
        %901 = vmatpush1.msra.mxu0 0.0
        %902 = vmatprep.mubr.f32.mxu0 0.0
        %903 = vmatmul.mubr.f32.gmra.mrb[0].mxu0 %v836
        %v904 = vpop.f32.mrb[0].mxu0
        %v905 = vadd.f32 0.0, %v904
        %v906 = vpop.f32.mrb[0].mxu0
        %907 = vdwg.mxu0
        %v908 = vadd.f32 %v835, %v905
        %v909 = vxor.u32 %v833, 2147483648
        %v910 = vmul.f32 %v909, 1.442695
        %v911 = vpow.pop %v910
        %v912 = vadd.f32 %v911, 1.0
        %v913 = vrcp.pop %v912
        %v914 = vmul.f32 1.0, %v913
        %v915 = vtanh.pop %v833
        %v916 = vxor.u32 %v908, 2147483648
        %v917 = vmul.f32 %v916, 1.442695
        %v918 = vpow.pop %v917
        %v919 = vadd.f32 %v918, 1.0
        %v920 = vrcp.pop %v919
        %v921 = vmul.f32 1.0, %v920
        %v922 = vtanh.pop %v908
        %v923 = vmul.f32 %v914, %v725
        %925 = vrot.lane.b32.xlu0 %v915, 32
        %v926 = vpop.permute.xlu0 %925
        %v928 = vmul.f32 %v914, %v926
        %930 = vrot.lane.b32.xlu0 %v928, 32
        %v931 = vpop.permute.xlu0 %930
        %v933 = vadd.f32 %v923, %v931
        %v934 = vmul.f32 %v921, %v736
        %936 = vrot.lane.b32.xlu0 %v922, 32
        %v937 = vpop.permute.xlu0 %936
        %v939 = vmul.f32 %v921, %v937
        %941 = vrot.lane.b32.xlu0 %v939, 32
        %v942 = vpop.permute.xlu0 %941
        %v944 = vadd.f32 %v934, %v942
        %v945 = vtanh.pop %v933
        %947 = vrot.lane.b32.xlu0 %v945, 32
        %v948 = vpop.permute.xlu0 %947
        %v950 = vmul.f32 %v914, %v948
        %v951 = vtanh.pop %v944
        %953 = vrot.lane.b32.xlu0 %v951, 32
        %v954 = vpop.permute.xlu0 %953
        %v956 = vmul.f32 %v921, %v954
        %958 = vrot.lane.b32.xlu0 %v950, 64
        %v959 = vpop.permute.xlu0 %958
        %v961 = vadd.f32 %v753, %v959
        %963 = vrot.lane.b32.xlu0 %v956, 64
        %v964 = vpop.permute.xlu0 %963
        %v966 = vadd.f32 %v758, %v964
        %s967 = scalar_lea.vmem %s295, 6
        %v968 = vld [vmem:[%s967] sm:$0x3]
        %v969 = vsel %vm330, %v959, 0
        %971 = vmatprep.subr.mxu0 0.0
        %972 = vmatpush1.msra.mxu0 %v326
        %973 = vmatprep.subr.mxu0 0.0
        %974 = vmatpush1.msra.mxu0 %v327
        %975 = vmatprep.subr.mxu0 0.0
        %976 = vmatpush1.msra.mxu0 %v328
        %977 = vmatprep.subr.mxu0 0.0
        %978 = vmatpush1.msra.mxu0 %v329
        %979 = vmatprep.subr.mxu0 0.0
        %980 = vmatpush1.msra.mxu0 0.0
        %981 = vmatprep.subr.mxu0 0.0
        %982 = vmatpush1.msra.mxu0 0.0
        %983 = vmatprep.subr.mxu0 0.0
        %984 = vmatpush1.msra.mxu0 0.0
        %985 = vmatprep.subr.mxu0 0.0
        %986 = vmatpush1.msra.mxu0 0.0
        %987 = vmatprep.subr.mxu0 0.0
        %988 = vmatpush1.msra.mxu0 0.0
        %989 = vmatprep.subr.mxu0 0.0
        %990 = vmatpush1.msra.mxu0 0.0
        %991 = vmatprep.subr.mxu0 0.0
        %992 = vmatpush1.msra.mxu0 0.0
        %993 = vmatprep.subr.mxu0 0.0
        %994 = vmatpush1.msra.mxu0 0.0
        %995 = vmatprep.subr.mxu0 0.0
        %996 = vmatpush1.msra.mxu0 0.0
        %997 = vmatprep.subr.mxu0 0.0
        %998 = vmatpush1.msra.mxu0 0.0
        %999 = vmatprep.subr.mxu0 0.0
        %1000 = vmatpush1.msra.mxu0 0.0
        %1001 = vmatprep.subr.mxu0 0.0
        %1002 = vmatpush1.msra.mxu0 0.0
        %1003 = vmatprep.subr.mxu0 0.0
        %1004 = vmatpush1.msra.mxu0 0.0
        %1005 = vmatprep.subr.mxu0 0.0
        %1006 = vmatpush1.msra.mxu0 0.0
        %1007 = vmatprep.subr.mxu0 0.0
        %1008 = vmatpush1.msra.mxu0 0.0
        %1009 = vmatprep.subr.mxu0 0.0
        %1010 = vmatpush1.msra.mxu0 0.0
        %1011 = vmatprep.subr.mxu0 0.0
        %1012 = vmatpush1.msra.mxu0 0.0
        %1013 = vmatprep.subr.mxu0 0.0
        %1014 = vmatpush1.msra.mxu0 0.0
        %1015 = vmatprep.subr.mxu0 0.0
        %1016 = vmatpush1.msra.mxu0 0.0
        %1017 = vmatprep.subr.mxu0 0.0
        %1018 = vmatpush1.msra.mxu0 0.0
        %1019 = vmatprep.subr.mxu0 0.0
        %1020 = vmatpush1.msra.mxu0 0.0
        %1021 = vmatprep.subr.mxu0 0.0
        %1022 = vmatpush1.msra.mxu0 0.0
        %1023 = vmatprep.subr.mxu0 0.0
        %1024 = vmatpush1.msra.mxu0 0.0
        %1025 = vmatprep.subr.mxu0 0.0
        %1026 = vmatpush1.msra.mxu0 0.0
        %1027 = vmatprep.subr.mxu0 0.0
        %1028 = vmatpush1.msra.mxu0 0.0
        %1029 = vmatprep.subr.mxu0 0.0
        %1030 = vmatpush1.msra.mxu0 0.0
        %1031 = vmatprep.subr.mxu0 0.0
        %1032 = vmatpush1.msra.mxu0 0.0
        %1033 = vmatprep.subr.mxu0 0.0
        %1034 = vmatpush1.msra.mxu0 0.0
        %1035 = vmatprep.mubr.f32.mxu0 0.0
        %1036 = vmatmul.mubr.f32.gmra.mrb[0].mxu0 %v969
        %v1037 = vpop.f32.mrb[0].mxu0
        %v1038 = vadd.f32 0.0, %v1037
        %v1039 = vpop.f32.mrb[0].mxu0
        %1040 = vdwg.mxu0
        %v1041 = vadd.f32 %v968, %v1038
        %v1042 = vld [vmem:[%s305] sm:$0x3]
        %v1043 = vsel %vm330, %v964, 0
        %1045 = vmatprep.subr.mxu0 0.0
        %1046 = vmatpush1.msra.mxu0 %v407
        %1047 = vmatprep.subr.mxu0 0.0
        %1048 = vmatpush1.msra.mxu0 %v408
        %1049 = vmatprep.subr.mxu0 0.0
        %1050 = vmatpush1.msra.mxu0 %v409
        %1051 = vmatprep.subr.mxu0 0.0
        %1052 = vmatpush1.msra.mxu0 %v410
        %1053 = vmatprep.subr.mxu0 0.0
        %1054 = vmatpush1.msra.mxu0 0.0
        %1055 = vmatprep.subr.mxu0 0.0
        %1056 = vmatpush1.msra.mxu0 0.0
        %1057 = vmatprep.subr.mxu0 0.0
        %1058 = vmatpush1.msra.mxu0 0.0
        %1059 = vmatprep.subr.mxu0 0.0
        %1060 = vmatpush1.msra.mxu0 0.0
        %1061 = vmatprep.subr.mxu0 0.0
        %1062 = vmatpush1.msra.mxu0 0.0
        %1063 = vmatprep.subr.mxu0 0.0
        %1064 = vmatpush1.msra.mxu0 0.0
        %1065 = vmatprep.subr.mxu0 0.0
        %1066 = vmatpush1.msra.mxu0 0.0
        %1067 = vmatprep.subr.mxu0 0.0
        %1068 = vmatpush1.msra.mxu0 0.0
        %1069 = vmatprep.subr.mxu0 0.0
        %1070 = vmatpush1.msra.mxu0 0.0
        %1071 = vmatprep.subr.mxu0 0.0
        %1072 = vmatpush1.msra.mxu0 0.0
        %1073 = vmatprep.subr.mxu0 0.0
        %1074 = vmatpush1.msra.mxu0 0.0
        %1075 = vmatprep.subr.mxu0 0.0
        %1076 = vmatpush1.msra.mxu0 0.0
        %1077 = vmatprep.subr.mxu0 0.0
        %1078 = vmatpush1.msra.mxu0 0.0
        %1079 = vmatprep.subr.mxu0 0.0
        %1080 = vmatpush1.msra.mxu0 0.0
        %1081 = vmatprep.subr.mxu0 0.0
        %1082 = vmatpush1.msra.mxu0 0.0
        %1083 = vmatprep.subr.mxu0 0.0
        %1084 = vmatpush1.msra.mxu0 0.0
        %1085 = vmatprep.subr.mxu0 0.0
        %1086 = vmatpush1.msra.mxu0 0.0
        %1087 = vmatprep.subr.mxu0 0.0
        %1088 = vmatpush1.msra.mxu0 0.0
        %1089 = vmatprep.subr.mxu0 0.0
        %1090 = vmatpush1.msra.mxu0 0.0
        %1091 = vmatprep.subr.mxu0 0.0
        %1092 = vmatpush1.msra.mxu0 0.0
        %1093 = vmatprep.subr.mxu0 0.0
        %1094 = vmatpush1.msra.mxu0 0.0
        %1095 = vmatprep.subr.mxu0 0.0
        %1096 = vmatpush1.msra.mxu0 0.0
        %1097 = vmatprep.subr.mxu0 0.0
        %1098 = vmatpush1.msra.mxu0 0.0
        %1099 = vmatprep.subr.mxu0 0.0
        %1100 = vmatpush1.msra.mxu0 0.0
        %1101 = vmatprep.subr.mxu0 0.0
        %1102 = vmatpush1.msra.mxu0 0.0
        %1103 = vmatprep.subr.mxu0 0.0
        %1104 = vmatpush1.msra.mxu0 0.0
        %1105 = vmatprep.subr.mxu0 0.0
        %1106 = vmatpush1.msra.mxu0 0.0
        %1107 = vmatprep.subr.mxu0 0.0
        %1108 = vmatpush1.msra.mxu0 0.0
        %1109 = vmatprep.mubr.f32.mxu0 0.0
        %1110 = vmatmul.mubr.f32.gmra.mrb[0].mxu0 %v1043
        %v1111 = vpop.f32.mrb[0].mxu0
        %v1112 = vadd.f32 0.0, %v1111
        %v1113 = vpop.f32.mrb[0].mxu0
        %1114 = vdwg.mxu0
        %v1115 = vadd.f32 %v1042, %v1112
        %v1116 = vxor.u32 %v1041, 2147483648
        %v1117 = vmul.f32 %v1116, 1.442695
        %v1118 = vpow.pop %v1117
        %v1119 = vadd.f32 %v1118, 1.0
        %v1120 = vrcp.pop %v1119
        %v1121 = vmul.f32 1.0, %v1120
        %v1122 = vtanh.pop %v1041
        %v1123 = vxor.u32 %v1115, 2147483648
        %v1124 = vmul.f32 %v1123, 1.442695
        %v1125 = vpow.pop %v1124
        %v1126 = vadd.f32 %v1125, 1.0
        %v1127 = vrcp.pop %v1126
        %v1128 = vmul.f32 1.0, %v1127
        %v1129 = vtanh.pop %v1115
        %v1130 = vmul.f32 %v1121, %v933
        %1132 = vrot.lane.b32.xlu0 %v1122, 32
        %v1133 = vpop.permute.xlu0 %1132
        %v1135 = vmul.f32 %v1121, %v1133
        %1137 = vrot.lane.b32.xlu0 %v1135, 32
        %v1138 = vpop.permute.xlu0 %1137
        %v1140 = vadd.f32 %v1130, %v1138
        %v1141 = vmul.f32 %v1128, %v944
        %1143 = vrot.lane.b32.xlu0 %v1129, 32
        %v1144 = vpop.permute.xlu0 %1143
        %v1146 = vmul.f32 %v1128, %v1144
        %1148 = vrot.lane.b32.xlu0 %v1146, 32
        %v1149 = vpop.permute.xlu0 %1148
        %v1151 = vadd.f32 %v1141, %v1149
        %v1152 = vtanh.pop %v1140
        %1154 = vrot.lane.b32.xlu0 %v1152, 32
        %v1155 = vpop.permute.xlu0 %1154
        %v1157 = vmul.f32 %v1121, %v1155
        %v1158 = vtanh.pop %v1151
        %1160 = vrot.lane.b32.xlu0 %v1158, 32
        %v1161 = vpop.permute.xlu0 %1160
        %v1163 = vmul.f32 %v1128, %v1161
        %1165 = vrot.lane.b32.xlu0 %v1157, 64
        %v1166 = vpop.permute.xlu0 %1165
        %v1168 = vadd.f32 %v961, %v1166
        %1170 = vrot.lane.b32.xlu0 %v1163, 64
        %v1171 = vpop.permute.xlu0 %1170
        %v1173 = vadd.f32 %v966, %v1171
        %vm1174 = vcmask 254976
        %1175 = vst.msk [vmem:[#allocation2] sm:$0x3] %vm1174, %v1166
        %1177 = vrot.lane.b32.xlu0 %v1140, 96
        %v1178 = vpop.permute.xlu0 %1177
        %1180 = vst.msk [vmem:[#allocation3] sm:$0x3] %vm1174, %v1178
        %1181 = vst.msk [vmem:[#allocation4] sm:$0x3] %vm1174, %v1171
        %1183 = vrot.lane.b32.xlu0 %v1151, 96
        %v1184 = vpop.permute.xlu0 %1183
        %1186 = vst.msk [vmem:[#allocation5] sm:$0x3] %vm1174, %v1184
        %1187 = vst.msk [vmem:[#allocation6] sm:$0x3] %vm1174, %v1168
        %1188 = vst.msk [vmem:[#allocation7] sm:$0x3] %vm1174, %v1173
        %p1189 = scmp.eq.s32.totalorder %s23, 1
        // Predicated region
        $region49: #{genre_lstm_forward.1} parent=43 // pred_check
          %p1190 = pneg %p1189
        $region50: #{genre_lstm_forward.1} parent=43 // pred_check_branch
          %1192 = sbr.rel (%p1190) target = $region52
        $region51: #{genre_lstm_forward.1} parent=43 // pred_region
          %v1193 = vld [vmem:[%s4] sm:$0xff]
          %v1194 = vld [vmem:[%s4 + $0x8] sm:$0xff]
          %v1195 = vld [vmem:[%s4 + $0x10] sm:$0xff]
          %v1196 = vld [vmem:[%s4 + $0x18] sm:$0xff]
          %v1197 = vld [vmem:[%s4 + $0x20] sm:$0xff]
          %v1198 = vld [vmem:[%s4 + $0x28] sm:$0xff]
          %v1199 = vld [vmem:[%s4 + $0x30] sm:$0xff]
          %v1200 = vld [vmem:[%s4 + $0x38] sm:$0xff]
          %v1201 = vmul.f32 %v1168, 0.125
          %v1202 = vmul.f32 %v1173, 0.125
          %v1204 = vsel %vm330, %v1202, 0
          %1206 = vmatprep.subr.mxu0 0.0
          %1207 = vmatpush1.msra.mxu0 %v1197
          %1208 = vmatprep.subr.mxu0 0.0
          %1209 = vmatpush1.msra.mxu0 %v1198
          %1210 = vmatprep.subr.mxu0 0.0
          %1211 = vmatpush1.msra.mxu0 %v1199
          %1212 = vmatprep.subr.mxu0 0.0
          %1213 = vmatpush1.msra.mxu0 %v1200
          %1214 = vmatprep.subr.mxu0 0.0
          %1215 = vmatpush1.msra.mxu0 0.0
          %1216 = vmatprep.subr.mxu0 0.0
          %1217 = vmatpush1.msra.mxu0 0.0
          %1218 = vmatprep.subr.mxu0 0.0
          %1219 = vmatpush1.msra.mxu0 0.0
          %1220 = vmatprep.subr.mxu0 0.0
          %1221 = vmatpush1.msra.mxu0 0.0
          %1222 = vmatprep.subr.mxu0 0.0
          %1223 = vmatpush1.msra.mxu0 0.0
          %1224 = vmatprep.subr.mxu0 0.0
          %1225 = vmatpush1.msra.mxu0 0.0
          %1226 = vmatprep.subr.mxu0 0.0
          %1227 = vmatpush1.msra.mxu0 0.0
          %1228 = vmatprep.subr.mxu0 0.0
          %1229 = vmatpush1.msra.mxu0 0.0
          %1230 = vmatprep.subr.mxu0 0.0
          %1231 = vmatpush1.msra.mxu0 0.0
          %1232 = vmatprep.subr.mxu0 0.0
          %1233 = vmatpush1.msra.mxu0 0.0
          %1234 = vmatprep.subr.mxu0 0.0
          %1235 = vmatpush1.msra.mxu0 0.0
          %1236 = vmatprep.subr.mxu0 0.0
          %1237 = vmatpush1.msra.mxu0 0.0
          %1238 = vmatprep.subr.mxu0 0.0
          %1239 = vmatpush1.msra.mxu0 0.0
          %1240 = vmatprep.subr.mxu0 0.0
          %1241 = vmatpush1.msra.mxu0 0.0
          %1242 = vmatprep.subr.mxu0 0.0
          %1243 = vmatpush1.msra.mxu0 0.0
          %1244 = vmatprep.subr.mxu0 0.0
          %1245 = vmatpush1.msra.mxu0 0.0
          %1246 = vmatprep.subr.mxu0 0.0
          %1247 = vmatpush1.msra.mxu0 0.0
          %1248 = vmatprep.subr.mxu0 0.0
          %1249 = vmatpush1.msra.mxu0 0.0
          %1250 = vmatprep.subr.mxu0 0.0
          %1251 = vmatpush1.msra.mxu0 0.0
          %1252 = vmatprep.subr.mxu0 0.0
          %1253 = vmatpush1.msra.mxu0 0.0
          %1254 = vmatprep.subr.mxu0 0.0
          %1255 = vmatpush1.msra.mxu0 0.0
          %1256 = vmatprep.subr.mxu0 0.0
          %1257 = vmatpush1.msra.mxu0 0.0
          %1258 = vmatprep.subr.mxu0 0.0
          %1259 = vmatpush1.msra.mxu0 0.0
          %1260 = vmatprep.subr.mxu0 0.0
          %1261 = vmatpush1.msra.mxu0 0.0
          %1262 = vmatprep.subr.mxu0 0.0
          %1263 = vmatpush1.msra.mxu0 0.0
          %1264 = vmatprep.subr.mxu0 0.0
          %1265 = vmatpush1.msra.mxu0 0.0
          %1266 = vmatprep.subr.mxu0 0.0
          %1267 = vmatpush1.msra.mxu0 0.0
          %1268 = vmatprep.subr.mxu0 0.0
          %1269 = vmatpush1.msra.mxu0 0.0
          %1270 = vmatprep.mubr.f32.mxu0 0.0
          %1271 = vmatmul.mubr.f32.gmra.mrb[0].mxu0 %v1204
          %v1272 = vpop.f32.mrb[0].mxu0
          %v1273 = vadd.f32 0.0, %v1272
          %v1274 = vpop.f32.mrb[0].mxu0
          %1275 = vdwg.mxu0
          %v1277 = vsel %vm330, %v1201, 0
          %1279 = vmatprep.subr.mxu0 0.0
          %1280 = vmatpush1.msra.mxu0 %v1193
          %1281 = vmatprep.subr.mxu0 0.0
          %1282 = vmatpush1.msra.mxu0 %v1194
          %1283 = vmatprep.subr.mxu0 0.0
          %1284 = vmatpush1.msra.mxu0 %v1195
          %1285 = vmatprep.subr.mxu0 0.0
          %1286 = vmatpush1.msra.mxu0 %v1196
          %1287 = vmatprep.subr.mxu0 0.0
          %1288 = vmatpush1.msra.mxu0 0.0
          %1289 = vmatprep.subr.mxu0 0.0
          %1290 = vmatpush1.msra.mxu0 0.0
          %1291 = vmatprep.subr.mxu0 0.0
          %1292 = vmatpush1.msra.mxu0 0.0
          %1293 = vmatprep.subr.mxu0 0.0
          %1294 = vmatpush1.msra.mxu0 0.0
          %1295 = vmatprep.subr.mxu0 0.0
          %1296 = vmatpush1.msra.mxu0 0.0
          %1297 = vmatprep.subr.mxu0 0.0
          %1298 = vmatpush1.msra.mxu0 0.0
          %1299 = vmatprep.subr.mxu0 0.0
          %1300 = vmatpush1.msra.mxu0 0.0
          %1301 = vmatprep.subr.mxu0 0.0
          %1302 = vmatpush1.msra.mxu0 0.0
          %1303 = vmatprep.subr.mxu0 0.0
          %1304 = vmatpush1.msra.mxu0 0.0
          %1305 = vmatprep.subr.mxu0 0.0
          %1306 = vmatpush1.msra.mxu0 0.0
          %1307 = vmatprep.subr.mxu0 0.0
          %1308 = vmatpush1.msra.mxu0 0.0
          %1309 = vmatprep.subr.mxu0 0.0
          %1310 = vmatpush1.msra.mxu0 0.0
          %1311 = vmatprep.subr.mxu0 0.0
          %1312 = vmatpush1.msra.mxu0 0.0
          %1313 = vmatprep.subr.mxu0 0.0
          %1314 = vmatpush1.msra.mxu0 0.0
          %1315 = vmatprep.subr.mxu0 0.0
          %1316 = vmatpush1.msra.mxu0 0.0
          %1317 = vmatprep.subr.mxu0 0.0
          %1318 = vmatpush1.msra.mxu0 0.0
          %1319 = vmatprep.subr.mxu0 0.0
          %1320 = vmatpush1.msra.mxu0 0.0
          %1321 = vmatprep.subr.mxu0 0.0
          %1322 = vmatpush1.msra.mxu0 0.0
          %1323 = vmatprep.subr.mxu0 0.0
          %1324 = vmatpush1.msra.mxu0 0.0
          %1325 = vmatprep.subr.mxu0 0.0
          %1326 = vmatpush1.msra.mxu0 0.0
          %1327 = vmatprep.subr.mxu0 0.0
          %1328 = vmatpush1.msra.mxu0 0.0
          %1329 = vmatprep.subr.mxu0 0.0
          %1330 = vmatpush1.msra.mxu0 0.0
          %1331 = vmatprep.subr.mxu0 0.0
          %1332 = vmatpush1.msra.mxu0 0.0
          %1333 = vmatprep.subr.mxu0 0.0
          %1334 = vmatpush1.msra.mxu0 0.0
          %1335 = vmatprep.subr.mxu0 0.0
          %1336 = vmatpush1.msra.mxu0 0.0
          %1337 = vmatprep.subr.mxu0 0.0
          %1338 = vmatpush1.msra.mxu0 0.0
          %1339 = vmatprep.subr.mxu0 0.0
          %1340 = vmatpush1.msra.mxu0 0.0
          %1341 = vmatprep.subr.mxu0 0.0
          %1342 = vmatpush1.msra.mxu0 0.0
          %1343 = vmatprep.mubr.f32.mxu0 0.0
          %1344 = vmatmul.mubr.f32.gmra.mrb[0].mxu0 %v1277
          %v1345 = vpop.f32.mrb[0].mxu0
          %v1346 = vadd.f32 %v1273, %v1345
          %v1347 = vpop.f32.mrb[0].mxu0
          %1348 = vdwg.mxu0
          %v1349 = vld [vmem:[%s5] sm:$0x1]
          %v1351 = vlaneseq
          %v1352 = vshrl.u32 %v1351, 7
          %v1353 = vsub.s32 0, %v1352
          %v1354 = vrot.slane %v1349, %v1353
          %v1356 = vadd.f32 %v1346, %v1354
          %1357 = vst [vmem:[#allocation8] sm:$0x3] %v1356
        $region52: #{genre_lstm_forward.1} parent=43 // pred_fallthru
          _
        // Predicated region
        $region53: #{genre_lstm_forward.1} parent=43 // pred_check
          %p1358 = pneg %p190
        $region54: #{genre_lstm_forward.1} parent=43 // pred_check_branch
          %1360 = sbr.rel (%p1358) target = $region56
        $region55: #{genre_lstm_forward.1} parent=43 // pred_region
          %s1362 = ssub.s32 32, 32
          %1363 = vsyncadd [#allocation9], %s1362
          %s1364 = smul.addr %s22, 32
          %s1365 = scalar_lea.hbm %s6, %s1364
          %s1367 = sshll.u32 [#allocation8], 4
          %s1368 = int_to_ptr.vmem [resolvable:$true] %s1367
          %1370 = dma.vmem_to_hbm [thread:$0]  %s1368, 32, %s1365, [#allocation9]
        $region56: #{genre_lstm_forward.1} parent=43 // pred_fallthru
          _
        // Predicated region
        $region57: #{genre_lstm_forward.1} parent=43 // pred_check
          %p1371 = pneg %p190
        $region58: #{genre_lstm_forward.1} parent=43 // pred_check_branch
          %1373 = sbr.rel (%p1371) target = $region60
        $region59: #{genre_lstm_forward.1} parent=43 // pred_region
          %1374 = dma.done [#allocation9], 32
        $region60: #{genre_lstm_forward.1} parent=43 // pred_fallthru
          _
      $region44: #{genre_lstm_forward.1} parent=5 // pred_fallthru
        _
      %p1375 = scmp.le.s32.totalorder 2, %s13
      // Predicated region
      $region61: #{genre_lstm_forward.1} parent=5 // pred_check
        %p1376 = pneg %p1375
      $region62: #{genre_lstm_forward.1} parent=5 // pred_check_branch
        %1378 = sbr.rel (%p1376) target = $region64
      $region63: #{genre_lstm_forward.1} parent=5 // pred_region
        %s1379 = ssub.s32 %s13, 2
      $region64: #{genre_lstm_forward.1} parent=5 // pred_fallthru
        _
    $region6: #{genre_lstm_forward.1} parent=1 // loop_footer
      %s17 = sadd.s32 1, %s13
    $region7: #{genre_lstm_forward.1} parent=1 // loop_footer_branch
      %12 = sbr.rel target = $region3
    $region8: #{genre_lstm_forward.1} parent=1 // loop_exit
      _
    %1380 = vsyncpa [#allocation9], 1
    %s1381 = scalar_lea.sflag [#allocation9], 1
    %1382 = vsyncpa %s1381, 1

</llo_original>
